<compile_context>
chip_gen: v6e
topology: v6e:2x2x1
jax: 0.10.0
libtpu: 0.0.40
codegen_flags: <defaults>
</compile_context>

<pallas_src>
import functools

import jax
import jax.numpy as jnp
from jax import lax
from jax.experimental import pallas as pl
from jax.experimental.pallas import tpu as pltpu

BN_EPS = 1e-5


# ----------------------------- Pallas kernels -----------------------------

def _linear_relu_kernel(x_ref, w_ref, b_ref, o_ref):
    # o = relu(x @ W + b); bf16 operands, f32 accumulation.
    y = jnp.dot(x_ref[...], w_ref[...], preferred_element_type=jnp.float32)
    o_ref[...] = jnp.maximum(y + b_ref[...], 0.0).astype(o_ref.dtype)


def _norm_relu_matmul_kernel(x_ref, s_ref, t_ref, w_ref, o_ref):
    # o = relu(x * s + t) @ W
    # (s, t) is the previous layer's folded conv-bias + BatchNorm affine, so
    # BN + ReLU are fused into this layer's tap-matmul for free.
    xn = jnp.maximum(x_ref[...].astype(jnp.float32) * s_ref[...] + t_ref[...], 0.0)
    y = jnp.dot(xn.astype(jnp.bfloat16), w_ref[...],
                preferred_element_type=jnp.float32)
    o_ref[...] = y.astype(o_ref.dtype)


def _conv1x1_tanh_kernel(x_ref, s_ref, t_ref, w_ref, b_ref, o_ref):
    # Lane-dense, channels-on-sublane output: o[c, m] = tanh(W[c,:]·xn[m,:] + b[c])
    xn = jnp.maximum(x_ref[0].astype(jnp.float32) * s_ref[...] + t_ref[...], 0.0)
    y = lax.dot_general(w_ref[...], xn.astype(jnp.bfloat16),
                        (((1,), (1,)), ((), ())),
                        preferred_element_type=jnp.float32)       # (8, ts)
    o_ref[0] = jnp.tanh(y + b_ref[...])


# ----------------------------- kernel wrappers -----------------------------

def linear_relu(x, w, b, *, tn_max=512):
    """relu(x @ W + b), N-tiled so the (K, N) weight streams through VMEM."""
    M, K = x.shape
    N = w.shape[1]
    tn = N if N <= tn_max else tn_max
    return pl.pallas_call(
        _linear_relu_kernel,
        out_shape=jax.ShapeDtypeStruct((M, N), jnp.bfloat16),
        grid=(pl.cdiv(N, tn),),
        in_specs=[pl.BlockSpec((M, K), lambda j: (0, 0)),
                  pl.BlockSpec((K, tn), lambda j: (0, j)),
                  pl.BlockSpec((1, tn), lambda j: (0, j))],
        out_specs=pl.BlockSpec((M, tn), lambda j: (0, j)),
        compiler_params=pltpu.CompilerParams(dimension_semantics=("parallel",)),
    )(x.astype(jnp.bfloat16), w.astype(jnp.bfloat16),
      b.reshape(1, N).astype(jnp.float32))


def norm_relu_matmul(x, scale, shift, w, *, tm_max=1024, tn_max=512):
    """relu(x * scale + shift) @ W, tiled over (M, N) with parallel grid axes."""
    M, K = x.shape
    N = w.shape[1]
    tm = M if M <= tm_max else tm_max
    tn = N if N <= tn_max else tn_max
    return pl.pallas_call(
        _norm_relu_matmul_kernel,
        out_shape=jax.ShapeDtypeStruct((M, N), jnp.bfloat16),
        grid=(pl.cdiv(M, tm), pl.cdiv(N, tn)),
        in_specs=[pl.BlockSpec((tm, K), lambda i, j: (i, 0)),
                  pl.BlockSpec((1, K), lambda i, j: (0, 0)),
                  pl.BlockSpec((1, K), lambda i, j: (0, 0)),
                  pl.BlockSpec((K, tn), lambda i, j: (0, j))],
        out_specs=pl.BlockSpec((tm, tn), lambda i, j: (i, j)),
        compiler_params=pltpu.CompilerParams(
            dimension_semantics=("parallel", "parallel")),
    )(x.astype(jnp.bfloat16),
      scale.reshape(1, K).astype(jnp.float32),
      shift.reshape(1, K).astype(jnp.float32),
      w.astype(jnp.bfloat16))


# -------------------- ConvTranspose2d + BN(train) + ReLU --------------------

# output parity -> ((kernel tap, input shift), ...) for k=4, stride=2, pad=1
_PARITY_TAPS = {0: ((1, 0), (3, -1)), 1: ((2, 0), (0, 1))}


def _shift2d(t, dm, dn):
    # u[b, i, j, c] = t[b, i + dm, j + dn, c], zero outside (dm, dn in {-1,0,1}).
    B, H, W, C = t.shape
    tp = jnp.pad(t, ((0, 0), (1, 1), (1, 1), (0, 0)))
    return tp[:, 1 + dm:1 + dm + H, 1 + dn:1 + dn + W, :]


def conv_transpose_layer(x_nhwc, in_scale, in_shift, w_t, bias, gamma, beta):
    """ConvTranspose2d(Cin, Cout, 4, stride=2, padding=1) with fused input
    normalization, followed by train-mode BatchNorm folded into a per-channel
    (scale, shift) consumed by the next kernel.

    x_nhwc : (B, H, W, Cin) raw previous activation (bf16)
    w_t    : PyTorch ConvTranspose2d weight (Cin, Cout, 4, 4)
    Returns (y_raw_plus_bias (B, 2H, 2W, Cout) bf16, out_scale, out_shift).
    """
    B, H, W, Cin = x_nhwc.shape
    Cout = w_t.shape[1]

    # (Cin, Cout, 4, 4) -> (Cin, 16*Cout), columns ordered (kh, kw, cout).
    w_taps = jnp.transpose(w_t, (0, 2, 3, 1)).reshape(Cin, 16 * Cout)

    # One non-redundant MXU matmul: every tap of every output pixel at once.
    taps = norm_relu_matmul(x_nhwc.reshape(B * H * W, Cin),
                            in_scale, in_shift, w_taps)
    taps = taps.astype(jnp.float32).reshape(B, H, W, 4, 4, Cout)

    # Overlap-add (pixel shuffle): out[b, 2m-1+kh, 2n-1+kw, c] += taps[b,m,n,kh,kw,c]
    par = [[None, None], [None, None]]
    for ph in (0, 1):
        for pw in (0, 1):
            acc = None
            for kh, dm in _PARITY_TAPS[ph]:
                for kw, dn in _PARITY_TAPS[pw]:
                    term = _shift2d(taps[:, :, :, kh, kw, :], dm, dn)
                    acc = term if acc is None else acc + term
            par[ph][pw] = acc
    even = jnp.stack([par[0][0], par[0][1]], axis=3)          # (B, H, W, 2, C)
    odd = jnp.stack([par[1][0], par[1][1]], axis=3)
    y = jnp.stack([even, odd], axis=2).reshape(B, 2 * H, 2 * W, Cout)
    y = y + bias.astype(jnp.float32)

    # Train-mode BatchNorm2d batch statistics (biased variance, like PyTorch
    # .train()), reduced over the full batch -> correct despite M-tiling.
    mean = jnp.mean(y, axis=(0, 1, 2))
    var = jnp.var(y, axis=(0, 1, 2))
    out_scale = gamma * lax.rsqrt(var + BN_EPS)
    out_shift = beta - mean * out_scale
    return y.astype(jnp.bfloat16), out_scale, out_shift


def conv1x1_tanh(x_nhwc, scale, shift, w, bias, *, ts_max=2048):
    """1x1 conv + tanh with the pending BN+ReLU fused on the input side.

    Output is produced channels-on-sublane / pixels-on-lane (lane-dense
    stores) and already matches NCHW, so no trailing transpose is needed.
    """
    B, H, W, Cin = x_nhwc.shape
    HW = H * W
    ts = HW if HW <= ts_max else ts_max
    x = x_nhwc.reshape(B, HW, Cin)

    # channels-on-sublane weights / bias, padded 3 -> 8 for a full sublane.
    w8 = jnp.zeros((8, Cin), jnp.float32).at[:3, :].set(w.T).astype(jnp.bfloat16)
    b8 = jnp.zeros((8, 1), jnp.float32).at[:3, 0].set(bias)

    out = pl.pallas_call(
        _conv1x1_tanh_kernel,
        out_shape=jax.ShapeDtypeStruct((B, 8, HW), jnp.float32),
        grid=(B, pl.cdiv(HW, ts)),
        in_specs=[pl.BlockSpec((1, ts, Cin), lambda bb, j: (bb, j, 0)),
                  pl.BlockSpec((1, Cin), lambda bb, j: (0, 0)),
                  pl.BlockSpec((1, Cin), lambda bb, j: (0, 0)),
                  pl.BlockSpec((8, Cin), lambda bb, j: (0, 0)),
                  pl.BlockSpec((8, 1), lambda bb, j: (0, 0))],
        out_specs=pl.BlockSpec((1, 8, ts), lambda bb, j: (bb, 0, j)),
        compiler_params=pltpu.CompilerParams(
            dimension_semantics=("parallel", "parallel")),
    )(x.astype(jnp.bfloat16),
      scale.reshape(1, Cin).astype(jnp.float32),
      shift.reshape(1, Cin).astype(jnp.float32),
      w8, b8)
    return out[:, :3, :].reshape(B, 3, H, W)      # already NCHW


# ----------------------------- Decoder model -----------------------------

def init_params(key, latent_size, end_channels, img_size, upsamplings):
    params = {}
    ks = iter(jax.random.split(key, 4 + 4 * upsamplings))

    def nrm(shape, scale=0.1):
        return scale * jax.random.normal(next(ks), shape, jnp.float32)

    hidden = 2 * latent_size
    flat = end_channels * img_size ** 2 // 2 ** upsamplings
    params["lin1_w"] = nrm((latent_size, hidden))          # stored (in, out)
    params["lin1_b"] = nrm((hidden,))
    params["lin2_w"] = nrm((hidden, flat))
    params["lin2_b"] = nrm((flat,))
    for li, i in enumerate(reversed(range(upsamplings))):
        cin = 2 ** (i + 1) * end_channels
        cout = 2 ** i * end_channels
        params[f"convt{li}_w"] = nrm((cin, cout, 4, 4))     # PyTorch ConvT layout
        params[f"convt{li}_b"] = nrm((cout,))
        params[f"bn{li}_gamma"] = jnp.ones((cout,), jnp.float32)
        params[f"bn{li}_beta"] = jnp.zeros((cout,), jnp.float32)
    params["conv_out_w"] = nrm((end_channels, 3))           # 1x1 conv, (Cin, Cout)
    params["conv_out_b"] = nrm((3,))
    return params


def decoder_forward(params, z, *, img_size, end_channels, upsamplings):
    start_channels = 2 ** upsamplings * end_channels
    size = img_size // 2 ** upsamplings
    B = z.shape[0]

    h = linear_relu(z, params["lin1_w"], params["lin1_b"])
    h = linear_relu(h, params["lin2_w"], params["lin2_b"])

    # nn.Unflatten(-1, (C0, s, s)) is NCHW; move to NHWC once (tiny tensor).
    x = h.reshape(B, start_channels, size, size).transpose(0, 2, 3, 1)

    # Identity scale/shift for the first conv (its input is already ReLU'd;
    # ReLU is idempotent so the fused relu(x*1+0) is a no-op).
    scale = jnp.ones((start_channels,), jnp.float32)
    shift = jnp.zeros((start_channels,), jnp.float32)

    for li in range(upsamplings):
        x, scale, shift = conv_transpose_layer(
            x, scale, shift,
            params[f"convt{li}_w"], params[f"convt{li}_b"],
            params[f"bn{li}_gamma"], params[f"bn{li}_beta"])

    # Final 1x1 conv + tanh; the last BN+ReLU are fused into it.
    return conv1x1_tanh(x, scale, shift,
                        params["conv_out_w"], params["conv_out_b"])


if __name__ == "__main__":
    # Small config consistent with the module: Decoder(img_size=16,
    # latent_size=32, end_channels=4, upsamplings=2), batch=2.
    IMG, LATENT, EC, UPS = 16, 32, 4, 2
    key = jax.random.PRNGKey(0)
    pkey, zkey = jax.random.split(key)
    params = init_params(pkey, LATENT, EC, IMG, UPS)
    z = jax.random.normal(zkey, (2, LATENT), jnp.float32)

    fwd = jax.jit(functools.partial(decoder_forward, img_size=IMG,
                                    end_channels=EC, upsamplings=UPS))
    out = fwd(params, z)
    jax.block_until_ready(out)

    assert out.shape == (2, 3, IMG, IMG), out.shape
    assert bool(jnp.all(jnp.isfinite(out)))
    assert bool(jnp.all(jnp.abs(out) <= 1.0))   # tanh range
    print("KERNEL_OK")
</pallas_src>

<mosaic_0001>
module attributes {stable_mosaic.version = 11 : i64} {
  func.func @_linear_relu_kernel(%arg0: i32, %arg1: memref<2x32xbf16, #tpu.memory_space<vmem>>, %arg2: memref<32x64xbf16, #tpu.memory_space<vmem>>, %arg3: memref<1x64xf32, #tpu.memory_space<vmem>>, %arg4: memref<2x64xbf16, #tpu.memory_space<vmem>>) attributes {dimension_semantics = [#tpu.dimension_semantics<parallel>], iteration_bounds = array<i64: 1>, scalar_prefetch = 0 : i64, scratch_operands = 0 : i64, tpu.core_type = #tpu.core_type<tc>, window_params = [{pipeline_mode = #tpu.pipeline_mode<synchronous>, transform_indices = @transform_0, window_bounds = array<i64: 2, 32>}, {transform_indices = @transform_1, window_bounds = array<i64: 32, 64>}, {transform_indices = @transform_2, window_bounds = array<i64: 1, 64>}, {transform_indices = @transform_3, window_bounds = array<i64: 2, 64>}]} {
    %c0 = arith.constant 0 : index
    %c0_0 = arith.constant 0 : index
    %0 = vector.load %arg1[%c0, %c0_0] : memref<2x32xbf16, #tpu.memory_space<vmem>>, vector<2x32xbf16>
    %c0_1 = arith.constant 0 : index
    %c0_2 = arith.constant 0 : index
    %1 = vector.load %arg2[%c0_1, %c0_2] : memref<32x64xbf16, #tpu.memory_space<vmem>>, vector<32x64xbf16>
    %cst = arith.constant dense<0.000000e+00> : vector<2x64xf32>
    %2 = tpu.matmul %0, %1, %cst {dimension_numbers = #tpu.dot_dimension_numbers<[1], [0], [0], [1], [0, 0, 1, 1], [], []>} : vector<2x32xbf16>, vector<32x64xbf16>, vector<2x64xf32> -> vector<2x64xf32>
    %c0_3 = arith.constant 0 : index
    %c0_4 = arith.constant 0 : index
    %3 = vector.load %arg3[%c0_3, %c0_4] : memref<1x64xf32, #tpu.memory_space<vmem>>, vector<1x64xf32>
    %4 = vector.broadcast %3 : vector<1x64xf32> to vector<2x64xf32>
    %5 = arith.addf %2, %4 : vector<2x64xf32>
    %cst_5 = arith.constant 0.000000e+00 : f32
    %6 = vector.broadcast %cst_5 : f32 to vector<2x64xf32>
    %7 = arith.maximumf %5, %6 : vector<2x64xf32>
    %8 = arith.truncf %7 : vector<2x64xf32> to vector<2x64xbf16>
    %c0_6 = arith.constant 0 : index
    %c0_7 = arith.constant 0 : index
    %9 = vector.load %arg4[%c0_6, %c0_7] : memref<2x64xbf16, #tpu.memory_space<vmem>>, vector<2x64xbf16>
    tpu.vector_store %arg4[%c0_6, %c0_7], %8 {strides = array<i32>} : memref<2x64xbf16, #tpu.memory_space<vmem>>, vector<2x64xbf16>,
    return
  }
  func.func @transform_0(%arg0: i32) -> (i32, i32) {
    %c0_i32 = arith.constant 0 : i32
    %c0_i32_0 = arith.constant 0 : i32
    %c0_i32_1 = arith.constant 0 : i32
    return %c0_i32, %c0_i32_0 : i32, i32
  }
  func.func @transform_1(%arg0: i32) -> (i32, i32) {
    %c0_i32 = arith.constant 0 : i32
    %c0_i32_0 = arith.constant 0 : i32
    return %c0_i32, %arg0 : i32, i32
  }
  func.func @transform_2(%arg0: i32) -> (i32, i32) {
    %c0_i32 = arith.constant 0 : i32
    %c0_i32_0 = arith.constant 0 : i32
    return %c0_i32, %arg0 : i32, i32
  }
  func.func @transform_3(%arg0: i32) -> (i32, i32) {
    %c0_i32 = arith.constant 0 : i32
    %c0_i32_0 = arith.constant 0 : i32
    return %c0_i32, %arg0 : i32, i32
  }
}

module attributes {stable_mosaic.version = 11 : i64} {
  func.func @_linear_relu_kernel(%arg0: i32, %arg1: memref<2x64xbf16, #tpu.memory_space<vmem>>, %arg2: memref<64x256xbf16, #tpu.memory_space<vmem>>, %arg3: memref<1x256xf32, #tpu.memory_space<vmem>>, %arg4: memref<2x256xbf16, #tpu.memory_space<vmem>>) attributes {dimension_semantics = [#tpu.dimension_semantics<parallel>], iteration_bounds = array<i64: 1>, scalar_prefetch = 0 : i64, scratch_operands = 0 : i64, tpu.core_type = #tpu.core_type<tc>, window_params = [{pipeline_mode = #tpu.pipeline_mode<synchronous>, transform_indices = @transform_0, window_bounds = array<i64: 2, 64>}, {transform_indices = @transform_1, window_bounds = array<i64: 64, 256>}, {transform_indices = @transform_2, window_bounds = array<i64: 1, 256>}, {transform_indices = @transform_3, window_bounds = array<i64: 2, 256>}]} {
    %c0 = arith.constant 0 : index
    %c0_0 = arith.constant 0 : index
    %0 = vector.load %arg1[%c0, %c0_0] : memref<2x64xbf16, #tpu.memory_space<vmem>>, vector<2x64xbf16>
    %c0_1 = arith.constant 0 : index
    %c0_2 = arith.constant 0 : index
    %1 = vector.load %arg2[%c0_1, %c0_2] : memref<64x256xbf16, #tpu.memory_space<vmem>>, vector<64x256xbf16>
    %cst = arith.constant dense<0.000000e+00> : vector<2x256xf32>
    %2 = tpu.matmul %0, %1, %cst {dimension_numbers = #tpu.dot_dimension_numbers<[1], [0], [0], [1], [0, 0, 1, 1], [], []>} : vector<2x64xbf16>, vector<64x256xbf16>, vector<2x256xf32> -> vector<2x256xf32>
    %c0_3 = arith.constant 0 : index
    %c0_4 = arith.constant 0 : index
    %3 = vector.load %arg3[%c0_3, %c0_4] : memref<1x256xf32, #tpu.memory_space<vmem>>, vector<1x256xf32>
    %4 = vector.broadcast %3 : vector<1x256xf32> to vector<2x256xf32>
    %5 = arith.addf %2, %4 : vector<2x256xf32>
    %cst_5 = arith.constant 0.000000e+00 : f32
    %6 = vector.broadcast %cst_5 : f32 to vector<2x256xf32>
    %7 = arith.maximumf %5, %6 : vector<2x256xf32>
    %8 = arith.truncf %7 : vector<2x256xf32> to vector<2x256xbf16>
    %c0_6 = arith.constant 0 : index
    %c0_7 = arith.constant 0 : index
    %9 = vector.load %arg4[%c0_6, %c0_7] : memref<2x256xbf16, #tpu.memory_space<vmem>>, vector<2x256xbf16>
    tpu.vector_store %arg4[%c0_6, %c0_7], %8 {strides = array<i32>} : memref<2x256xbf16, #tpu.memory_space<vmem>>, vector<2x256xbf16>,
    return
  }
  func.func @transform_0(%arg0: i32) -> (i32, i32) {
    %c0_i32 = arith.constant 0 : i32
    %c0_i32_0 = arith.constant 0 : i32
    %c0_i32_1 = arith.constant 0 : i32
    return %c0_i32, %c0_i32_0 : i32, i32
  }
  func.func @transform_1(%arg0: i32) -> (i32, i32) {
    %c0_i32 = arith.constant 0 : i32
    %c0_i32_0 = arith.constant 0 : i32
    return %c0_i32, %arg0 : i32, i32
  }
  func.func @transform_2(%arg0: i32) -> (i32, i32) {
    %c0_i32 = arith.constant 0 : i32
    %c0_i32_0 = arith.constant 0 : i32
    return %c0_i32, %arg0 : i32, i32
  }
  func.func @transform_3(%arg0: i32) -> (i32, i32) {
    %c0_i32 = arith.constant 0 : i32
    %c0_i32_0 = arith.constant 0 : i32
    return %c0_i32, %arg0 : i32, i32
  }
}

module attributes {stable_mosaic.version = 11 : i64} {
  func.func @_norm_relu_matmul_kernel(%arg0: i32, %arg1: i32, %arg2: memref<32x16xbf16, #tpu.memory_space<vmem>>, %arg3: memref<1x16xf32, #tpu.memory_space<vmem>>, %arg4: memref<1x16xf32, #tpu.memory_space<vmem>>, %arg5: memref<16x128xbf16, #tpu.memory_space<vmem>>, %arg6: memref<32x128xbf16, #tpu.memory_space<vmem>>) attributes {dimension_semantics = [#tpu.dimension_semantics<parallel>, #tpu.dimension_semantics<parallel>], iteration_bounds = array<i64: 1, 1>, scalar_prefetch = 0 : i64, scratch_operands = 0 : i64, tpu.core_type = #tpu.core_type<tc>, window_params = [{transform_indices = @transform_0, window_bounds = array<i64: 32, 16>}, {pipeline_mode = #tpu.pipeline_mode<synchronous>, transform_indices = @transform_1, window_bounds = array<i64: 1, 16>}, {pipeline_mode = #tpu.pipeline_mode<synchronous>, transform_indices = @transform_2, window_bounds = array<i64: 1, 16>}, {transform_indices = @transform_3, window_bounds = array<i64: 16, 128>}, {transform_indices = @transform_4, window_bounds = array<i64: 32, 128>}]} {
    %c0 = arith.constant 0 : index
    %c0_0 = arith.constant 0 : index
    %0 = vector.load %arg2[%c0, %c0_0] : memref<32x16xbf16, #tpu.memory_space<vmem>>, vector<32x16xbf16>
    %1 = arith.extf %0 : vector<32x16xbf16> to vector<32x16xf32>
    %c0_1 = arith.constant 0 : index
    %c0_2 = arith.constant 0 : index
    %2 = vector.load %arg3[%c0_1, %c0_2] : memref<1x16xf32, #tpu.memory_space<vmem>>, vector<1x16xf32>
    %3 = vector.broadcast %2 : vector<1x16xf32> to vector<32x16xf32>
    %4 = arith.mulf %1, %3 : vector<32x16xf32>
    %c0_3 = arith.constant 0 : index
    %c0_4 = arith.constant 0 : index
    %5 = vector.load %arg4[%c0_3, %c0_4] : memref<1x16xf32, #tpu.memory_space<vmem>>, vector<1x16xf32>
    %6 = vector.broadcast %5 : vector<1x16xf32> to vector<32x16xf32>
    %7 = arith.addf %4, %6 : vector<32x16xf32>
    %cst = arith.constant 0.000000e+00 : f32
    %8 = vector.broadcast %cst : f32 to vector<32x16xf32>
    %9 = arith.maximumf %7, %8 : vector<32x16xf32>
    %10 = arith.truncf %9 : vector<32x16xf32> to vector<32x16xbf16>
    %c0_5 = arith.constant 0 : index
    %c0_6 = arith.constant 0 : index
    %11 = vector.load %arg5[%c0_5, %c0_6] : memref<16x128xbf16, #tpu.memory_space<vmem>>, vector<16x128xbf16>
    %cst_7 = arith.constant dense<0.000000e+00> : vector<32x128xf32>
    %12 = tpu.matmul %10, %11, %cst_7 {dimension_numbers = #tpu.dot_dimension_numbers<[1], [0], [0], [1], [0, 0, 1, 1], [], []>} : vector<32x16xbf16>, vector<16x128xbf16>, vector<32x128xf32> -> vector<32x128xf32>
    %13 = arith.truncf %12 : vector<32x128xf32> to vector<32x128xbf16>
    %c0_8 = arith.constant 0 : index
    %c0_9 = arith.constant 0 : index
    %14 = vector.load %arg6[%c0_8, %c0_9] : memref<32x128xbf16, #tpu.memory_space<vmem>>, vector<32x128xbf16>
    tpu.vector_store %arg6[%c0_8, %c0_9], %13 {strides = array<i32>} : memref<32x128xbf16, #tpu.memory_space<vmem>>, vector<32x128xbf16>,
    return
  }
  func.func @transform_0(%arg0: i32, %arg1: i32) -> (i32, i32) {
    %c0_i32 = arith.constant 0 : i32
    %c0_i32_0 = arith.constant 0 : i32
    return %arg0, %c0_i32 : i32, i32
  }
  func.func @transform_1(%arg0: i32, %arg1: i32) -> (i32, i32) {
    %c0_i32 = arith.constant 0 : i32
    %c0_i32_0 = arith.constant 0 : i32
    %c0_i32_1 = arith.constant 0 : i32
    return %c0_i32, %c0_i32_0 : i32, i32
  }
  func.func @transform_2(%arg0: i32, %arg1: i32) -> (i32, i32) {
    %c0_i32 = arith.constant 0 : i32
    %c0_i32_0 = arith.constant 0 : i32
    %c0_i32_1 = arith.constant 0 : i32
    return %c0_i32, %c0_i32_0 : i32, i32
  }
  func.func @transform_3(%arg0: i32, %arg1: i32) -> (i32, i32) {
    %c0_i32 = arith.constant 0 : i32
    %c0_i32_0 = arith.constant 0 : i32
    return %c0_i32, %arg1 : i32, i32
  }
  func.func @transform_4(%arg0: i32, %arg1: i32) -> (i32, i32) {
    %c0_i32 = arith.constant 0 : i32
    return %arg0, %arg1 : i32, i32
  }
}

module attributes {stable_mosaic.version = 11 : i64} {
  func.func @_norm_relu_matmul_kernel(%arg0: i32, %arg1: i32, %arg2: memref<128x8xbf16, #tpu.memory_space<vmem>>, %arg3: memref<1x8xf32, #tpu.memory_space<vmem>>, %arg4: memref<1x8xf32, #tpu.memory_space<vmem>>, %arg5: memref<8x64xbf16, #tpu.memory_space<vmem>>, %arg6: memref<128x64xbf16, #tpu.memory_space<vmem>>) attributes {dimension_semantics = [#tpu.dimension_semantics<parallel>, #tpu.dimension_semantics<parallel>], iteration_bounds = array<i64: 1, 1>, scalar_prefetch = 0 : i64, scratch_operands = 0 : i64, tpu.core_type = #tpu.core_type<tc>, window_params = [{transform_indices = @transform_0, window_bounds = array<i64: 128, 8>}, {pipeline_mode = #tpu.pipeline_mode<synchronous>, transform_indices = @transform_1, window_bounds = array<i64: 1, 8>}, {pipeline_mode = #tpu.pipeline_mode<synchronous>, transform_indices = @transform_2, window_bounds = array<i64: 1, 8>}, {transform_indices = @transform_3, window_bounds = array<i64: 8, 64>}, {transform_indices = @transform_4, window_bounds = array<i64: 128, 64>}]} {
    %c0 = arith.constant 0 : index
    %c0_0 = arith.constant 0 : index
    %0 = vector.load %arg2[%c0, %c0_0] : memref<128x8xbf16, #tpu.memory_space<vmem>>, vector<128x8xbf16>
    %1 = arith.extf %0 : vector<128x8xbf16> to vector<128x8xf32>
    %c0_1 = arith.constant 0 : index
    %c0_2 = arith.constant 0 : index
    %2 = vector.load %arg3[%c0_1, %c0_2] : memref<1x8xf32, #tpu.memory_space<vmem>>, vector<1x8xf32>
    %3 = vector.broadcast %2 : vector<1x8xf32> to vector<128x8xf32>
    %4 = arith.mulf %1, %3 : vector<128x8xf32>
    %c0_3 = arith.constant 0 : index
    %c0_4 = arith.constant 0 : index
    %5 = vector.load %arg4[%c0_3, %c0_4] : memref<1x8xf32, #tpu.memory_space<vmem>>, vector<1x8xf32>
    %6 = vector.broadcast %5 : vector<1x8xf32> to vector<128x8xf32>
    %7 = arith.addf %4, %6 : vector<128x8xf32>
    %cst = arith.constant 0.000000e+00 : f32
    %8 = vector.broadcast %cst : f32 to vector<128x8xf32>
    %9 = arith.maximumf %7, %8 : vector<128x8xf32>
    %10 = arith.truncf %9 : vector<128x8xf32> to vector<128x8xbf16>
    %c0_5 = arith.constant 0 : index
    %c0_6 = arith.constant 0 : index
    %11 = vector.load %arg5[%c0_5, %c0_6] : memref<8x64xbf16, #tpu.memory_space<vmem>>, vector<8x64xbf16>
    %cst_7 = arith.constant dense<0.000000e+00> : vector<128x64xf32>
    %12 = tpu.matmul %10, %11, %cst_7 {dimension_numbers = #tpu.dot_dimension_numbers<[1], [0], [0], [1], [0, 0, 1, 1], [], []>} : vector<128x8xbf16>, vector<8x64xbf16>, vector<128x64xf32> -> vector<128x64xf32>
    %13 = arith.truncf %12 : vector<128x64xf32> to vector<128x64xbf16>
    %c0_8 = arith.constant 0 : index
    %c0_9 = arith.constant 0 : index
    %14 = vector.load %arg6[%c0_8, %c0_9] : memref<128x64xbf16, #tpu.memory_space<vmem>>, vector<128x64xbf16>
    tpu.vector_store %arg6[%c0_8, %c0_9], %13 {strides = array<i32>} : memref<128x64xbf16, #tpu.memory_space<vmem>>, vector<128x64xbf16>,
    return
  }
  func.func @transform_0(%arg0: i32, %arg1: i32) -> (i32, i32) {
    %c0_i32 = arith.constant 0 : i32
    %c0_i32_0 = arith.constant 0 : i32
    return %arg0, %c0_i32 : i32, i32
  }
  func.func @transform_1(%arg0: i32, %arg1: i32) -> (i32, i32) {
    %c0_i32 = arith.constant 0 : i32
    %c0_i32_0 = arith.constant 0 : i32
    %c0_i32_1 = arith.constant 0 : i32
    return %c0_i32, %c0_i32_0 : i32, i32
  }
  func.func @transform_2(%arg0: i32, %arg1: i32) -> (i32, i32) {
    %c0_i32 = arith.constant 0 : i32
    %c0_i32_0 = arith.constant 0 : i32
    %c0_i32_1 = arith.constant 0 : i32
    return %c0_i32, %c0_i32_0 : i32, i32
  }
  func.func @transform_3(%arg0: i32, %arg1: i32) -> (i32, i32) {
    %c0_i32 = arith.constant 0 : i32
    %c0_i32_0 = arith.constant 0 : i32
    return %c0_i32, %arg1 : i32, i32
  }
  func.func @transform_4(%arg0: i32, %arg1: i32) -> (i32, i32) {
    %c0_i32 = arith.constant 0 : i32
    return %arg0, %arg1 : i32, i32
  }
}

module attributes {stable_mosaic.version = 11 : i64} {
  func.func @_conv1x1_tanh_kernel(%arg0: i32, %arg1: i32, %arg2: memref<1x256x4xbf16, #tpu.memory_space<vmem>>, %arg3: memref<1x4xf32, #tpu.memory_space<vmem>>, %arg4: memref<1x4xf32, #tpu.memory_space<vmem>>, %arg5: memref<8x4xbf16, #tpu.memory_space<vmem>>, %arg6: memref<8x1xf32, #tpu.memory_space<vmem>>, %arg7: memref<1x8x256xf32, #tpu.memory_space<vmem>>) attributes {dimension_semantics = [#tpu.dimension_semantics<parallel>, #tpu.dimension_semantics<parallel>], iteration_bounds = array<i64: 2, 1>, scalar_prefetch = 0 : i64, scratch_operands = 0 : i64, tpu.core_type = #tpu.core_type<tc>, window_params = [{transform_indices = @transform_0, window_bounds = array<i64: 1, 256, 4>}, {pipeline_mode = #tpu.pipeline_mode<synchronous>, transform_indices = @transform_1, window_bounds = array<i64: 1, 4>}, {pipeline_mode = #tpu.pipeline_mode<synchronous>, transform_indices = @transform_2, window_bounds = array<i64: 1, 4>}, {pipeline_mode = #tpu.pipeline_mode<synchronous>, transform_indices = @transform_3, window_bounds = array<i64: 8, 4>}, {pipeline_mode = #tpu.pipeline_mode<synchronous>, transform_indices = @transform_4, window_bounds = array<i64: 8, 1>}, {transform_indices = @transform_5, window_bounds = array<i64: 1, 8, 256>}]} {
    %c0 = arith.constant 0 : index
    %c0_0 = arith.constant 0 : index
    %c0_1 = arith.constant 0 : index
    %0 = vector.load %arg2[%c0, %c0_0, %c0_1] : memref<1x256x4xbf16, #tpu.memory_space<vmem>>, vector<1x256x4xbf16>
    %1 = vector.shape_cast %0 : vector<1x256x4xbf16> to vector<256x4xbf16>
    %2 = arith.extf %1 : vector<256x4xbf16> to vector<256x4xf32>
    %c0_2 = arith.constant 0 : index
    %c0_3 = arith.constant 0 : index
    %3 = vector.load %arg3[%c0_2, %c0_3] : memref<1x4xf32, #tpu.memory_space<vmem>>, vector<1x4xf32>
    %4 = vector.broadcast %3 : vector<1x4xf32> to vector<256x4xf32>
    %5 = arith.mulf %2, %4 : vector<256x4xf32>
    %c0_4 = arith.constant 0 : index
    %c0_5 = arith.constant 0 : index
    %6 = vector.load %arg4[%c0_4, %c0_5] : memref<1x4xf32, #tpu.memory_space<vmem>>, vector<1x4xf32>
    %7 = vector.broadcast %6 : vector<1x4xf32> to vector<256x4xf32>
    %8 = arith.addf %5, %7 : vector<256x4xf32>
    %cst = arith.constant 0.000000e+00 : f32
    %9 = vector.broadcast %cst : f32 to vector<256x4xf32>
    %10 = arith.maximumf %8, %9 : vector<256x4xf32>
    %c0_6 = arith.constant 0 : index
    %c0_7 = arith.constant 0 : index
    %11 = vector.load %arg5[%c0_6, %c0_7] : memref<8x4xbf16, #tpu.memory_space<vmem>>, vector<8x4xbf16>
    %12 = arith.truncf %10 : vector<256x4xf32> to vector<256x4xbf16>
    %cst_8 = arith.constant dense<0.000000e+00> : vector<8x256xf32>
    %13 = tpu.matmul %11, %12, %cst_8 {dimension_numbers = #tpu.dot_dimension_numbers<[1], [1], [0], [0], [0, 0, 1, 0], [], []>} : vector<8x4xbf16>, vector<256x4xbf16>, vector<8x256xf32> -> vector<8x256xf32>
    %c0_9 = arith.constant 0 : index
    %c0_10 = arith.constant 0 : index
    %14 = vector.load %arg6[%c0_9, %c0_10] : memref<8x1xf32, #tpu.memory_space<vmem>>, vector<8x1xf32>
    %15 = vector.broadcast %14 : vector<8x1xf32> to vector<8x256xf32>
    %16 = arith.addf %13, %15 : vector<8x256xf32>
    %17 = math.tanh %16 : vector<8x256xf32>
    %c0_11 = arith.constant 0 : index
    %c0_12 = arith.constant 0 : index
    %c0_13 = arith.constant 0 : index
    %18 = vector.load %arg7[%c0_11, %c0_12, %c0_13] : memref<1x8x256xf32, #tpu.memory_space<vmem>>, vector<1x8x256xf32>
    %19 = vector.shape_cast %18 : vector<1x8x256xf32> to vector<8x256xf32>
    %20 = vector.shape_cast %17 : vector<8x256xf32> to vector<1x8x256xf32>
    tpu.vector_store %arg7[%c0_11, %c0_12, %c0_13], %20 {strides = array<i32>} : memref<1x8x256xf32, #tpu.memory_space<vmem>>, vector<1x8x256xf32>,
    return
  }
  func.func @transform_0(%arg0: i32, %arg1: i32) -> (i32, i32, i32) {
    %c0_i32 = arith.constant 0 : i32
    %c0_i32_0 = arith.constant 0 : i32
    return %arg0, %arg1, %c0_i32 : i32, i32, i32
  }
  func.func @transform_1(%arg0: i32, %arg1: i32) -> (i32, i32) {
    %c0_i32 = arith.constant 0 : i32
    %c0_i32_0 = arith.constant 0 : i32
    %c0_i32_1 = arith.constant 0 : i32
    return %c0_i32, %c0_i32_0 : i32, i32
  }
  func.func @transform_2(%arg0: i32, %arg1: i32) -> (i32, i32) {
    %c0_i32 = arith.constant 0 : i32
    %c0_i32_0 = arith.constant 0 : i32
    %c0_i32_1 = arith.constant 0 : i32
    return %c0_i32, %c0_i32_0 : i32, i32
  }
  func.func @transform_3(%arg0: i32, %arg1: i32) -> (i32, i32) {
    %c0_i32 = arith.constant 0 : i32
    %c0_i32_0 = arith.constant 0 : i32
    %c0_i32_1 = arith.constant 0 : i32
    return %c0_i32, %c0_i32_0 : i32, i32
  }
  func.func @transform_4(%arg0: i32, %arg1: i32) -> (i32, i32) {
    %c0_i32 = arith.constant 0 : i32
    %c0_i32_0 = arith.constant 0 : i32
    %c0_i32_1 = arith.constant 0 : i32
    return %c0_i32, %c0_i32_0 : i32, i32
  }
  func.func @transform_5(%arg0: i32, %arg1: i32) -> (i32, i32, i32) {
    %c0_i32 = arith.constant 0 : i32
    %c0_i32_0 = arith.constant 0 : i32
    return %arg0, %c0_i32, %arg1 : i32, i32, i32
  }
}

</mosaic_0001>

<llo_original>
// kernel: decoder_forward.5
$region0: #{decoder_forward.5}
  #allocation0 [shape = 'u32[]', space=smem, size = 0x4, offset = 0x4, fixed_abs, tag = 'smem constant byte address 0x4 - core index']
  #allocation1 [shape = 'u32[144,128]{1,0:T(1,128)}', space=vmem, size = 0x12000, scoped, tag = 'internal scratch']
  %s0 = inlined_call_operand.vmem [shape: bf16[2,32], index: 0, kind: input, shape index: {}]
  %s1 = inlined_call_operand.vmem [shape: bf16[32,64], index: 1, kind: input, shape index: {}]
  %s2 = inlined_call_operand.vmem [shape: f32[1,64], index: 2, kind: input, shape index: {}]
  %s3 = inlined_call_operand.vmem [shape: bf16[2,64], index: 3, kind: output, shape index: {}]
  %s4 = sld [smem:[#allocation0]]
  $region22: #{decoder_forward.5} parent=0
    _
  %s6 = ssub.s32 1, %s4
  %s7 = scalar_select 0, %s6, %s4
  // Predicated region
  $region2: #{decoder_forward.5} parent=0 // pred_check
    _
  $region3: #{decoder_forward.5} parent=0 // pred_check_branch
    %9 = sbr.rel (0) target = $region5
  $region4: #{decoder_forward.5} parent=0 // pred_region
    _
  $region5: #{decoder_forward.5} parent=0 // pred_fallthru
    _
  // Predicated region
  $region6: #{decoder_forward.5} parent=0 // pred_check
    _
  $region7: #{decoder_forward.5} parent=0 // pred_check_branch
    %11 = sbr.rel (0) target = $region9
  $region8: #{decoder_forward.5} parent=0 // pred_region
    _
  $region9: #{decoder_forward.5} parent=0 // pred_fallthru
    _
  // Predicated region
  $region10: #{decoder_forward.5} parent=0 // pred_check
    _
  $region11: #{decoder_forward.5} parent=0 // pred_check_branch
    %13 = sbr.rel (0) target = $region13
  $region12: #{decoder_forward.5} parent=0 // pred_region
    _
  $region13: #{decoder_forward.5} parent=0 // pred_fallthru
    _
  %v15 = vld [vmem:[%s0] sm:$0x1]
  %v16 = vld [vmem:[%s1] sm:$0xf]
  %v17 = vld [vmem:[%s1 + $0x4] sm:$0xf]
  %v18 = vld [vmem:[%s1 + $0x8] sm:$0xf]
  %v19 = vld [vmem:[%s1 + $0xc] sm:$0xf]
  %v20 = vld [vmem:[%s2] sm:$0x1]
  %v22 = vlaneseq
  %v23 = vshrl.u32 %v22, 7
  %v24 = vsub.s32 0, %v23
  %v25 = vrot.slane %v20, %v24
  %v31 = vunpack.c.l.b16 %v16
  %v32 = vunpack.c.l.b16 %v17
  %v33 = vunpack.c.l.b16 %v18
  %v34 = vunpack.c.l.b16 %v19
  %v35 = vpack.c.b16 %v32, %v31
  %v36 = vpack.c.b16 %v34, %v33
  %vm39 = vcmask 261120
  %v41 = vsel %vm39, %v15, 0
  %43 = vmatprep.subr.bf16.mxu0 0
  %44 = vmatpush1.bf16.msra.mxu0 0
  %45 = vmatprep.subr.bf16.mxu0 0
  %46 = vmatpush1.bf16.msra.mxu0 0
  %47 = vmatprep.subr.bf16.mxu0 0
  %48 = vmatpush1.bf16.msra.mxu0 0
  %49 = vmatprep.subr.bf16.mxu0 0
  %50 = vmatpush1.bf16.msra.mxu0 0
  %51 = vmatprep.subr.bf16.mxu0 0
  %52 = vmatpush1.bf16.msra.mxu0 0
  %53 = vmatprep.subr.bf16.mxu0 0
  %54 = vmatpush1.bf16.msra.mxu0 0
  %55 = vmatprep.subr.bf16.mxu0 0
  %56 = vmatpush1.bf16.msra.mxu0 %v36
  %57 = vmatprep.subr.bf16.mxu0 0
  %58 = vmatpush1.bf16.msra.mxu0 %v35
  %59 = vmatprep.subr.bf16.mxu0 0
  %60 = vmatpush2.bf16.msra.mxu0 0
  %61 = vmatprep.subr.bf16.mxu0 0
  %62 = vmatpush2.bf16.msra.mxu0 0
  %63 = vmatprep.subr.bf16.mxu0 0
  %64 = vmatpush2.bf16.msra.mxu0 0
  %65 = vmatprep.subr.bf16.mxu0 0
  %66 = vmatpush2.bf16.msra.mxu0 0
  %67 = vmatprep.subr.bf16.mxu0 0
  %68 = vmatpush2.bf16.msra.mxu0 0
  %69 = vmatprep.subr.bf16.mxu0 0
  %70 = vmatpush2.bf16.msra.mxu0 0
  %71 = vmatprep.subr.bf16.mxu0 0
  %72 = vmatpush2.bf16.msra.mxu0 0
  %73 = vmatprep.subr.bf16.mxu0 0
  %74 = vmatpush2.bf16.msra.mxu0 0
  %75 = vmatprep.mubr.bf16.mxu0 0
  %76 = vmatmul.mubr.bf16.gmra.mxu0 %v41
  %v77 = vpop.f32.mrf.mxu0
  %v78 = vadd.f32 %v25, %v77
  %v79 = vpop.f32.mrf.mxu0
  %v80 = vpop.f32.mrf.mxu0
  %v81 = vpop.f32.mrf.mxu0
  %82 = vdwg.mxu0
  %v83 = vmax.f32 %v78, 0.0
  %v84 = vpack.c.bf16 %v83, %v83
  %vm85 = vcmask 516096
  %86 = vst.msk [vmem:[%s3] sm:$0x1] %vm85, %v84
  // Predicated region
  $region14: #{decoder_forward.5} parent=0 // pred_check
    _
  $region15: #{decoder_forward.5} parent=0 // pred_check_branch
    %88 = sbr.rel (0) target = $region17
  $region16: #{decoder_forward.5} parent=0 // pred_region
    _
  $region17: #{decoder_forward.5} parent=0 // pred_fallthru
    _
  // Predicated region
  $region18: #{decoder_forward.5} parent=0 // pred_check
    _
  $region19: #{decoder_forward.5} parent=0 // pred_check_branch
    %90 = sbr.rel (0) target = $region21
  $region20: #{decoder_forward.5} parent=0 // pred_region
    _
  $region21: #{decoder_forward.5} parent=0 // pred_fallthru
    _

// kernel: decoder_forward.6
$region0: #{decoder_forward.6}
  #allocation0 [shape = 'u32[]', space=smem, size = 0x4, offset = 0x4, fixed_abs, tag = 'smem constant byte address 0x4 - core index']
  #allocation1 [shape = 'u32[144,128]{1,0:T(1,128)}', space=vmem, size = 0x12000, scoped, tag = 'internal scratch']
  %s0 = inlined_call_operand.vmem [shape: bf16[2,64], index: 0, kind: input, shape index: {}]
  %s1 = inlined_call_operand.vmem [shape: bf16[64,256], index: 1, kind: input, shape index: {}]
  %s2 = inlined_call_operand.vmem [shape: f32[1,256], index: 2, kind: input, shape index: {}]
  %s3 = inlined_call_operand.vmem [shape: bf16[2,256], index: 3, kind: output, shape index: {}]
  %s4 = sld [smem:[#allocation0]]
  $region22: #{decoder_forward.6} parent=0
    _
  %s6 = ssub.s32 1, %s4
  %s7 = scalar_select 0, %s6, %s4
  // Predicated region
  $region2: #{decoder_forward.6} parent=0 // pred_check
    _
  $region3: #{decoder_forward.6} parent=0 // pred_check_branch
    %9 = sbr.rel (0) target = $region5
  $region4: #{decoder_forward.6} parent=0 // pred_region
    _
  $region5: #{decoder_forward.6} parent=0 // pred_fallthru
    _
  // Predicated region
  $region6: #{decoder_forward.6} parent=0 // pred_check
    _
  $region7: #{decoder_forward.6} parent=0 // pred_check_branch
    %11 = sbr.rel (0) target = $region9
  $region8: #{decoder_forward.6} parent=0 // pred_region
    _
  $region9: #{decoder_forward.6} parent=0 // pred_fallthru
    _
  // Predicated region
  $region10: #{decoder_forward.6} parent=0 // pred_check
    _
  $region11: #{decoder_forward.6} parent=0 // pred_check_branch
    %13 = sbr.rel (0) target = $region13
  $region12: #{decoder_forward.6} parent=0 // pred_region
    _
  $region13: #{decoder_forward.6} parent=0 // pred_fallthru
    _
  %v15 = vld [vmem:[%s0] sm:$0x1]
  %v16 = vld [vmem:[%s1] sm:$0xff]
  %v17 = vld [vmem:[%s1 + $0x8] sm:$0xff]
  %v18 = vld [vmem:[%s1 + $0x10] sm:$0xff]
  %v19 = vld [vmem:[%s1 + $0x18] sm:$0xff]
  %v20 = vld [vmem:[%s1 + $0x20] sm:$0xff]
  %v21 = vld [vmem:[%s1 + $0x28] sm:$0xff]
  %v22 = vld [vmem:[%s1 + $0x30] sm:$0xff]
  %v23 = vld [vmem:[%s1 + $0x38] sm:$0xff]
  %v24 = vld [vmem:[%s2] sm:$0x3]
  %v26 = vlaneseq
  %v27 = vshrl.u32 %v26, 7
  %v28 = vsub.s32 0, %v27
  %v29 = vrot.slane %v24, %v28
  %v30 = vlaneseq
  %v31 = vshrl.u32 %v30, 7
  %v32 = vsub.s32 1, %v31
  %v33 = vrot.slane %v24, %v32
  %v44 = vunpack.c.l.b16 %v16
  %v45 = vunpack.c.h.b16 %v16
  %v46 = vunpack.c.l.b16 %v17
  %v47 = vunpack.c.h.b16 %v17
  %v48 = vunpack.c.l.b16 %v18
  %v49 = vunpack.c.h.b16 %v18
  %v50 = vunpack.c.l.b16 %v19
  %v51 = vunpack.c.h.b16 %v19
  %v52 = vunpack.c.l.b16 %v20
  %v53 = vunpack.c.h.b16 %v20
  %v54 = vunpack.c.l.b16 %v21
  %v55 = vunpack.c.h.b16 %v21
  %v56 = vunpack.c.l.b16 %v22
  %v57 = vunpack.c.h.b16 %v22
  %v58 = vunpack.c.l.b16 %v23
  %v59 = vunpack.c.h.b16 %v23
  %v60 = vpack.c.b16 %v46, %v44
  %v61 = vpack.c.b16 %v47, %v45
  %v62 = vpack.c.b16 %v50, %v48
  %v63 = vpack.c.b16 %v51, %v49
  %v64 = vpack.c.b16 %v54, %v52
  %v65 = vpack.c.b16 %v55, %v53
  %v66 = vpack.c.b16 %v58, %v56
  %v67 = vpack.c.b16 %v59, %v57
  %vm76 = vcmask 523264
  %v78 = vsel %vm76, %v15, 0
  %80 = vmatprep.subr.bf16.mxu0 0
  %81 = vmatpush1.bf16.msra.mxu0 0
  %82 = vmatprep.subr.bf16.mxu0 0
  %83 = vmatpush1.bf16.msra.mxu0 0
  %84 = vmatprep.subr.bf16.mxu0 0
  %85 = vmatpush1.bf16.msra.mxu0 0
  %86 = vmatprep.subr.bf16.mxu0 0
  %87 = vmatpush1.bf16.msra.mxu0 0
  %88 = vmatprep.subr.bf16.mxu0 %v67
  %89 = vmatpush1.bf16.msra.mxu0 %v66
  %90 = vmatprep.subr.bf16.mxu0 %v65
  %91 = vmatpush1.bf16.msra.mxu0 %v64
  %92 = vmatprep.subr.bf16.mxu0 %v63
  %93 = vmatpush1.bf16.msra.mxu0 %v62
  %94 = vmatprep.subr.bf16.mxu0 %v61
  %95 = vmatpush1.bf16.msra.mxu0 %v60
  %96 = vmatprep.subr.bf16.mxu0 0
  %97 = vmatpush2.bf16.msra.mxu0 0
  %98 = vmatprep.subr.bf16.mxu0 0
  %99 = vmatpush2.bf16.msra.mxu0 0
  %100 = vmatprep.subr.bf16.mxu0 0
  %101 = vmatpush2.bf16.msra.mxu0 0
  %102 = vmatprep.subr.bf16.mxu0 0
  %103 = vmatpush2.bf16.msra.mxu0 0
  %104 = vmatprep.subr.bf16.mxu0 0
  %105 = vmatpush2.bf16.msra.mxu0 0
  %106 = vmatprep.subr.bf16.mxu0 0
  %107 = vmatpush2.bf16.msra.mxu0 0
  %108 = vmatprep.subr.bf16.mxu0 0
  %109 = vmatpush2.bf16.msra.mxu0 0
  %110 = vmatprep.subr.bf16.mxu0 0
  %111 = vmatpush2.bf16.msra.mxu0 0
  %112 = vmatprep.mubr.bf16.mxu0 0
  %113 = vmatmul.mubr.bf16.gmra.mxu0 %v78
  %v114 = vpop.f32.mrf.mxu0
  %v115 = vadd.f32 %v29, %v114
  %v116 = vpop.f32.mrf.mxu0
  %v117 = vadd.f32 %v33, %v116
  %v118 = vpop.f32.mrf.mxu0
  %v119 = vpop.f32.mrf.mxu0
  %120 = vdwg.mxu0
  %v121 = vmax.f32 %v115, 0.0
  %v122 = vmax.f32 %v117, 0.0
  %v123 = vpack.c.bf16 %v121, %v121
  %v124 = vpack.c.bf16 %v122, %v122
  %v127 = vcombine.low %v123, %v124
  %v129 = vunpack.c.l.s4 1966171168
  %v130 = vunpack.c.0.s8 %v129
  %v131 = vlaneseq
  %v132 = vshrl.u32 %v131, 7
  %v133 = vsub.s32 %v130, %v132
  %v134 = vrot.slane %v127, %v133
  %v136 = vunpack.c.l.s4 1966171168
  %v137 = vunpack.c.0.s8 %v136
  %v138 = vlaneseq
  %v139 = vshrl.u32 %v138, 7
  %v140 = vsub.s32 %v137, %v139
  %v141 = vrot.slane %v134, %v140
  %143 = vst [vmem:[%s3] sm:$0x3] %v141
  // Predicated region
  $region14: #{decoder_forward.6} parent=0 // pred_check
    _
  $region15: #{decoder_forward.6} parent=0 // pred_check_branch
    %145 = sbr.rel (0) target = $region17
  $region16: #{decoder_forward.6} parent=0 // pred_region
    _
  $region17: #{decoder_forward.6} parent=0 // pred_fallthru
    _
  // Predicated region
  $region18: #{decoder_forward.6} parent=0 // pred_check
    _
  $region19: #{decoder_forward.6} parent=0 // pred_check_branch
    %147 = sbr.rel (0) target = $region21
  $region20: #{decoder_forward.6} parent=0 // pred_region
    _
  $region21: #{decoder_forward.6} parent=0 // pred_fallthru
    _

// kernel: decoder_forward.7
$region0: #{decoder_forward.7}
  #allocation0 [shape = 'u32[]', space=smem, size = 0x4, offset = 0x4, fixed_abs, tag = 'smem constant byte address 0x4 - core index']
  #allocation1 [shape = 'u32[144,128]{1,0:T(1,128)}', space=vmem, size = 0x12000, scoped, tag = 'internal scratch']
  %s0 = inlined_call_operand.vmem [shape: bf16[32,16], index: 0, kind: input, shape index: {}]
  %s1 = inlined_call_operand.vmem [shape: f32[1,16], index: 1, kind: input, shape index: {}]
  %s2 = inlined_call_operand.vmem [shape: f32[1,16], index: 2, kind: input, shape index: {}]
  %s3 = inlined_call_operand.vmem [shape: bf16[16,128], index: 3, kind: input, shape index: {}]
  %s4 = inlined_call_operand.vmem [shape: bf16[32,128], index: 4, kind: output, shape index: {}]
  %s5 = sld [smem:[#allocation0]]
  $region26: #{decoder_forward.7} parent=0
    _
  %s7 = ssub.s32 1, %s5
  %s8 = scalar_select 0, %s7, %s5
  // Predicated region
  $region2: #{decoder_forward.7} parent=0 // pred_check
    _
  $region3: #{decoder_forward.7} parent=0 // pred_check_branch
    %10 = sbr.rel (0) target = $region5
  $region4: #{decoder_forward.7} parent=0 // pred_region
    _
  $region5: #{decoder_forward.7} parent=0 // pred_fallthru
    _
  // Predicated region
  $region6: #{decoder_forward.7} parent=0 // pred_check
    _
  $region7: #{decoder_forward.7} parent=0 // pred_check_branch
    %12 = sbr.rel (0) target = $region9
  $region8: #{decoder_forward.7} parent=0 // pred_region
    _
  $region9: #{decoder_forward.7} parent=0 // pred_fallthru
    _
  // Predicated region
  $region10: #{decoder_forward.7} parent=0 // pred_check
    _
  $region11: #{decoder_forward.7} parent=0 // pred_check_branch
    %14 = sbr.rel (0) target = $region13
  $region12: #{decoder_forward.7} parent=0 // pred_region
    _
  $region13: #{decoder_forward.7} parent=0 // pred_fallthru
    _
  // Predicated region
  $region14: #{decoder_forward.7} parent=0 // pred_check
    _
  $region15: #{decoder_forward.7} parent=0 // pred_check_branch
    %16 = sbr.rel (0) target = $region17
  $region16: #{decoder_forward.7} parent=0 // pred_region
    _
  $region17: #{decoder_forward.7} parent=0 // pred_fallthru
    _
  %v18 = vld [vmem:[%s0] sm:$0xf]
  %v19 = vld [vmem:[%s0 + $0x4] sm:$0xf]
  %v20 = vld [vmem:[%s0 + $0x8] sm:$0xf]
  %v21 = vld [vmem:[%s0 + $0xc] sm:$0xf]
  %v22 = vunpack.c.l.bf16 %v18
  %v23 = vunpack.c.l.bf16 %v19
  %v24 = vunpack.c.l.bf16 %v20
  %v25 = vunpack.c.l.bf16 %v21
  %v26 = vld [vmem:[%s1] sm:$0x1]
  %v28 = vlaneseq
  %v29 = vshrl.u32 %v28, 7
  %v30 = vsub.s32 0, %v29
  %v31 = vrot.slane %v26, %v30
  %v33 = vmul.f32 %v22, %v31
  %v34 = vmul.f32 %v23, %v31
  %v35 = vmul.f32 %v24, %v31
  %v36 = vmul.f32 %v25, %v31
  %v37 = vld [vmem:[%s2] sm:$0x1]
  %v39 = vlaneseq
  %v40 = vshrl.u32 %v39, 7
  %v41 = vsub.s32 0, %v40
  %v42 = vrot.slane %v37, %v41
  %v44 = vadd.f32 %v33, %v42
  %v45 = vadd.f32 %v34, %v42
  %v46 = vadd.f32 %v35, %v42
  %v47 = vadd.f32 %v36, %v42
  %v48 = vmax.f32 %v44, 0.0
  %v49 = vmax.f32 %v45, 0.0
  %v50 = vmax.f32 %v46, 0.0
  %v51 = vmax.f32 %v47, 0.0
  %v52 = vpack.c.bf16 %v49, %v48
  %v53 = vpack.c.bf16 %v51, %v50
  %v54 = vld [vmem:[%s3] sm:$0xf]
  %v55 = vld [vmem:[%s3 + $0x4] sm:$0xf]
  %v58 = vunpack.c.l.b16 %v54
  %v59 = vunpack.c.l.b16 %v55
  %v60 = vpack.c.b16 %v59, %v58
  %vm62 = vcmask 130048
  %v64 = vsel %vm62, %v52, 0
  %v67 = vsel %vm62, %v53, 0
  %69 = vmatprep.subr.bf16.mxu0 0
  %70 = vmatpush1.bf16.msra.mxu0 0
  %71 = vmatprep.subr.bf16.mxu0 0
  %72 = vmatpush1.bf16.msra.mxu0 0
  %73 = vmatprep.subr.bf16.mxu0 0
  %74 = vmatpush1.bf16.msra.mxu0 0
  %75 = vmatprep.subr.bf16.mxu0 0
  %76 = vmatpush1.bf16.msra.mxu0 0
  %77 = vmatprep.subr.bf16.mxu0 0
  %78 = vmatpush1.bf16.msra.mxu0 0
  %79 = vmatprep.subr.bf16.mxu0 0
  %80 = vmatpush1.bf16.msra.mxu0 0
  %81 = vmatprep.subr.bf16.mxu0 0
  %82 = vmatpush1.bf16.msra.mxu0 0
  %83 = vmatprep.subr.bf16.mxu0 0
  %84 = vmatpush1.bf16.msra.mxu0 %v60
  %85 = vmatprep.subr.bf16.mxu0 0
  %86 = vmatpush2.bf16.msra.mxu0 0
  %87 = vmatprep.subr.bf16.mxu0 0
  %88 = vmatpush2.bf16.msra.mxu0 0
  %89 = vmatprep.subr.bf16.mxu0 0
  %90 = vmatpush2.bf16.msra.mxu0 0
  %91 = vmatprep.subr.bf16.mxu0 0
  %92 = vmatpush2.bf16.msra.mxu0 0
  %93 = vmatprep.subr.bf16.mxu0 0
  %94 = vmatpush2.bf16.msra.mxu0 0
  %95 = vmatprep.subr.bf16.mxu0 0
  %96 = vmatpush2.bf16.msra.mxu0 0
  %97 = vmatprep.subr.bf16.mxu0 0
  %98 = vmatpush2.bf16.msra.mxu0 0
  %99 = vmatprep.subr.bf16.mxu0 0
  %100 = vmatpush2.bf16.msra.mxu0 0
  %101 = vmatprep.mubr.bf16.mxu0 0
  %102 = vmatmul.mubr.bf16.gmra.mxu0 %v64
  %v103 = vpop.f32.mrf.mxu0
  %v104 = vadd.f32 0.0, %v103
  %v105 = vpop.f32.mrf.mxu0
  %v106 = vpop.f32.mrf.mxu0
  %v107 = vadd.f32 0.0, %v106
  %v108 = vpop.f32.mrf.mxu0
  %109 = vmatprep.mubr.bf16.mxu0 0
  %110 = vmatmul.mubr.bf16.gmra.mxu0 %v67
  %v111 = vpop.f32.mrf.mxu0
  %v112 = vadd.f32 0.0, %v111
  %v113 = vpop.f32.mrf.mxu0
  %v114 = vpop.f32.mrf.mxu0
  %v115 = vadd.f32 0.0, %v114
  %v116 = vpop.f32.mrf.mxu0
  %117 = vdwg.mxu0
  %v118 = vpack.c.bf16 %v107, %v104
  %v119 = vpack.c.bf16 %v115, %v112
  %v122 = vunpack.c.l.b16 %v118
  %v123 = vunpack.c.h.b16 %v118
  %v124 = vunpack.c.l.b16 %v119
  %v125 = vunpack.c.h.b16 %v119
  %v126 = vpack.c.b16 %v122, %v122
  %v127 = vpack.c.b16 %v123, %v123
  %v128 = vpack.c.b16 %v124, %v124
  %v129 = vpack.c.b16 %v125, %v125
  %134 = vst [vmem:[%s4] sm:$0xf] %v126
  %135 = vst [vmem:[%s4 + $0x4] sm:$0xf] %v127
  %136 = vst [vmem:[%s4 + $0x8] sm:$0xf] %v128
  %137 = vst [vmem:[%s4 + $0xc] sm:$0xf] %v129
  // Predicated region
  $region18: #{decoder_forward.7} parent=0 // pred_check
    _
  $region19: #{decoder_forward.7} parent=0 // pred_check_branch
    %139 = sbr.rel (0) target = $region21
  $region20: #{decoder_forward.7} parent=0 // pred_region
    _
  $region21: #{decoder_forward.7} parent=0 // pred_fallthru
    _
  // Predicated region
  $region22: #{decoder_forward.7} parent=0 // pred_check
    _
  $region23: #{decoder_forward.7} parent=0 // pred_check_branch
    %141 = sbr.rel (0) target = $region25
  $region24: #{decoder_forward.7} parent=0 // pred_region
    _
  $region25: #{decoder_forward.7} parent=0 // pred_fallthru
    _

// kernel: decoder_forward.8
$region0: #{decoder_forward.8}
  #allocation0 [shape = 'u32[]', space=smem, size = 0x4, offset = 0x4, fixed_abs, tag = 'smem constant byte address 0x4 - core index']
  #allocation1 [shape = 'u32[144,128]{1,0:T(1,128)}', space=vmem, size = 0x12000, scoped, tag = 'internal scratch']
  %s0 = inlined_call_operand.vmem [shape: bf16[128,8], index: 0, kind: input, shape index: {}]
  %s1 = inlined_call_operand.vmem [shape: f32[1,8], index: 1, kind: input, shape index: {}]
  %s2 = inlined_call_operand.vmem [shape: f32[1,8], index: 2, kind: input, shape index: {}]
  %s3 = inlined_call_operand.vmem [shape: bf16[8,64], index: 3, kind: input, shape index: {}]
  %s4 = inlined_call_operand.vmem [shape: bf16[128,64], index: 4, kind: output, shape index: {}]
  %s5 = sld [smem:[#allocation0]]
  $region26: #{decoder_forward.8} parent=0
    _
  %s7 = ssub.s32 1, %s5
  %s8 = scalar_select 0, %s7, %s5
  // Predicated region
  $region2: #{decoder_forward.8} parent=0 // pred_check
    _
  $region3: #{decoder_forward.8} parent=0 // pred_check_branch
    %10 = sbr.rel (0) target = $region5
  $region4: #{decoder_forward.8} parent=0 // pred_region
    _
  $region5: #{decoder_forward.8} parent=0 // pred_fallthru
    _
  // Predicated region
  $region6: #{decoder_forward.8} parent=0 // pred_check
    _
  $region7: #{decoder_forward.8} parent=0 // pred_check_branch
    %12 = sbr.rel (0) target = $region9
  $region8: #{decoder_forward.8} parent=0 // pred_region
    _
  $region9: #{decoder_forward.8} parent=0 // pred_fallthru
    _
  // Predicated region
  $region10: #{decoder_forward.8} parent=0 // pred_check
    _
  $region11: #{decoder_forward.8} parent=0 // pred_check_branch
    %14 = sbr.rel (0) target = $region13
  $region12: #{decoder_forward.8} parent=0 // pred_region
    _
  $region13: #{decoder_forward.8} parent=0 // pred_fallthru
    _
  // Predicated region
  $region14: #{decoder_forward.8} parent=0 // pred_check
    _
  $region15: #{decoder_forward.8} parent=0 // pred_check_branch
    %16 = sbr.rel (0) target = $region17
  $region16: #{decoder_forward.8} parent=0 // pred_region
    _
  $region17: #{decoder_forward.8} parent=0 // pred_fallthru
    _
  %v18 = vld [vmem:[%s0] sm:$0xf]
  %v19 = vld [vmem:[%s0 + $0x4] sm:$0xf]
  %v20 = vld [vmem:[%s0 + $0x8] sm:$0xf]
  %v21 = vld [vmem:[%s0 + $0xc] sm:$0xf]
  %v22 = vld [vmem:[%s0 + $0x10] sm:$0xf]
  %v23 = vld [vmem:[%s0 + $0x14] sm:$0xf]
  %v24 = vld [vmem:[%s0 + $0x18] sm:$0xf]
  %v25 = vld [vmem:[%s0 + $0x1c] sm:$0xf]
  %v26 = vld [vmem:[%s0 + $0x20] sm:$0xf]
  %v27 = vld [vmem:[%s0 + $0x24] sm:$0xf]
  %v28 = vld [vmem:[%s0 + $0x28] sm:$0xf]
  %v29 = vld [vmem:[%s0 + $0x2c] sm:$0xf]
  %v30 = vld [vmem:[%s0 + $0x30] sm:$0xf]
  %v31 = vld [vmem:[%s0 + $0x34] sm:$0xf]
  %v32 = vld [vmem:[%s0 + $0x38] sm:$0xf]
  %v33 = vld [vmem:[%s0 + $0x3c] sm:$0xf]
  %v34 = vunpack.c.l.bf16 %v18
  %v35 = vunpack.c.l.bf16 %v19
  %v36 = vunpack.c.l.bf16 %v20
  %v37 = vunpack.c.l.bf16 %v21
  %v38 = vunpack.c.l.bf16 %v22
  %v39 = vunpack.c.l.bf16 %v23
  %v40 = vunpack.c.l.bf16 %v24
  %v41 = vunpack.c.l.bf16 %v25
  %v42 = vunpack.c.l.bf16 %v26
  %v43 = vunpack.c.l.bf16 %v27
  %v44 = vunpack.c.l.bf16 %v28
  %v45 = vunpack.c.l.bf16 %v29
  %v46 = vunpack.c.l.bf16 %v30
  %v47 = vunpack.c.l.bf16 %v31
  %v48 = vunpack.c.l.bf16 %v32
  %v49 = vunpack.c.l.bf16 %v33
  %v50 = vld [vmem:[%s1] sm:$0x1]
  %v52 = vlaneseq
  %v53 = vshrl.u32 %v52, 7
  %v54 = vsub.s32 0, %v53
  %v55 = vrot.slane %v50, %v54
  %v57 = vmul.f32 %v34, %v55
  %v58 = vmul.f32 %v35, %v55
  %v59 = vmul.f32 %v36, %v55
  %v60 = vmul.f32 %v37, %v55
  %v61 = vmul.f32 %v38, %v55
  %v62 = vmul.f32 %v39, %v55
  %v63 = vmul.f32 %v40, %v55
  %v64 = vmul.f32 %v41, %v55
  %v65 = vmul.f32 %v42, %v55
  %v66 = vmul.f32 %v43, %v55
  %v67 = vmul.f32 %v44, %v55
  %v68 = vmul.f32 %v45, %v55
  %v69 = vmul.f32 %v46, %v55
  %v70 = vmul.f32 %v47, %v55
  %v71 = vmul.f32 %v48, %v55
  %v72 = vmul.f32 %v49, %v55
  %v73 = vld [vmem:[%s2] sm:$0x1]
  %v75 = vlaneseq
  %v76 = vshrl.u32 %v75, 7
  %v77 = vsub.s32 0, %v76
  %v78 = vrot.slane %v73, %v77
  %v80 = vadd.f32 %v57, %v78
  %v81 = vadd.f32 %v58, %v78
  %v82 = vadd.f32 %v59, %v78
  %v83 = vadd.f32 %v60, %v78
  %v84 = vadd.f32 %v61, %v78
  %v85 = vadd.f32 %v62, %v78
  %v86 = vadd.f32 %v63, %v78
  %v87 = vadd.f32 %v64, %v78
  %v88 = vadd.f32 %v65, %v78
  %v89 = vadd.f32 %v66, %v78
  %v90 = vadd.f32 %v67, %v78
  %v91 = vadd.f32 %v68, %v78
  %v92 = vadd.f32 %v69, %v78
  %v93 = vadd.f32 %v70, %v78
  %v94 = vadd.f32 %v71, %v78
  %v95 = vadd.f32 %v72, %v78
  %v96 = vmax.f32 %v80, 0.0
  %v97 = vmax.f32 %v81, 0.0
  %v98 = vmax.f32 %v82, 0.0
  %v99 = vmax.f32 %v83, 0.0
  %v100 = vmax.f32 %v84, 0.0
  %v101 = vmax.f32 %v85, 0.0
  %v102 = vmax.f32 %v86, 0.0
  %v103 = vmax.f32 %v87, 0.0
  %v104 = vmax.f32 %v88, 0.0
  %v105 = vmax.f32 %v89, 0.0
  %v106 = vmax.f32 %v90, 0.0
  %v107 = vmax.f32 %v91, 0.0
  %v108 = vmax.f32 %v92, 0.0
  %v109 = vmax.f32 %v93, 0.0
  %v110 = vmax.f32 %v94, 0.0
  %v111 = vmax.f32 %v95, 0.0
  %v112 = vpack.c.bf16 %v97, %v96
  %v113 = vpack.c.bf16 %v99, %v98
  %v114 = vpack.c.bf16 %v101, %v100
  %v115 = vpack.c.bf16 %v103, %v102
  %v116 = vpack.c.bf16 %v105, %v104
  %v117 = vpack.c.bf16 %v107, %v106
  %v118 = vpack.c.bf16 %v109, %v108
  %v119 = vpack.c.bf16 %v111, %v110
  %v120 = vld [vmem:[%s3] sm:$0xf]
  %vm121 = vcmask 64512
  %v123 = vsel %vm121, %v112, 0
  %v126 = vsel %vm121, %v113, 0
  %v129 = vsel %vm121, %v114, 0
  %v132 = vsel %vm121, %v115, 0
  %v135 = vsel %vm121, %v116, 0
  %v138 = vsel %vm121, %v117, 0
  %v141 = vsel %vm121, %v118, 0
  %v144 = vsel %vm121, %v119, 0
  %vm146 = vcmask 1043456
  %v148 = vsel %vm146, %v120, 0
  %150 = vmatprep.subr.bf16.mxu0 0
  %151 = vmatpush1.bf16.msra.mxu0 0
  %152 = vmatprep.subr.bf16.mxu0 0
  %153 = vmatpush1.bf16.msra.mxu0 0
  %154 = vmatprep.subr.bf16.mxu0 0
  %155 = vmatpush1.bf16.msra.mxu0 0
  %156 = vmatprep.subr.bf16.mxu0 0
  %157 = vmatpush1.bf16.msra.mxu0 0
  %158 = vmatprep.subr.bf16.mxu0 0
  %159 = vmatpush1.bf16.msra.mxu0 0
  %160 = vmatprep.subr.bf16.mxu0 0
  %161 = vmatpush1.bf16.msra.mxu0 0
  %162 = vmatprep.subr.bf16.mxu0 0
  %163 = vmatpush1.bf16.msra.mxu0 0
  %164 = vmatprep.subr.bf16.mxu0 0
  %165 = vmatpush1.bf16.msra.mxu0 %v148
  %166 = vmatprep.subr.bf16.mxu0 0
  %167 = vmatpush2.bf16.msra.mxu0 0
  %168 = vmatprep.subr.bf16.mxu0 0
  %169 = vmatpush2.bf16.msra.mxu0 0
  %170 = vmatprep.subr.bf16.mxu0 0
  %171 = vmatpush2.bf16.msra.mxu0 0
  %172 = vmatprep.subr.bf16.mxu0 0
  %173 = vmatpush2.bf16.msra.mxu0 0
  %174 = vmatprep.subr.bf16.mxu0 0
  %175 = vmatpush2.bf16.msra.mxu0 0
  %176 = vmatprep.subr.bf16.mxu0 0
  %177 = vmatpush2.bf16.msra.mxu0 0
  %178 = vmatprep.subr.bf16.mxu0 0
  %179 = vmatpush2.bf16.msra.mxu0 0
  %180 = vmatprep.subr.bf16.mxu0 0
  %181 = vmatpush2.bf16.msra.mxu0 0
  %182 = vmatprep.mubr.bf16.mxu0 0
  %183 = vmatmul.mubr.bf16.gmra.mxu0 %v123
  %v184 = vpop.f32.mrf.mxu0
  %v185 = vadd.f32 0.0, %v184
  %v186 = vpop.f32.mrf.mxu0
  %v187 = vpop.f32.mrf.mxu0
  %v188 = vadd.f32 0.0, %v187
  %v189 = vpop.f32.mrf.mxu0
  %190 = vmatprep.mubr.bf16.mxu0 0
  %191 = vmatmul.mubr.bf16.gmra.mxu0 %v126
  %v192 = vpop.f32.mrf.mxu0
  %v193 = vadd.f32 0.0, %v192
  %v194 = vpop.f32.mrf.mxu0
  %v195 = vpop.f32.mrf.mxu0
  %v196 = vadd.f32 0.0, %v195
  %v197 = vpop.f32.mrf.mxu0
  %198 = vmatprep.mubr.bf16.mxu0 0
  %199 = vmatmul.mubr.bf16.gmra.mxu0 %v129
  %v200 = vpop.f32.mrf.mxu0
  %v201 = vadd.f32 0.0, %v200
  %v202 = vpop.f32.mrf.mxu0
  %v203 = vpop.f32.mrf.mxu0
  %v204 = vadd.f32 0.0, %v203
  %v205 = vpop.f32.mrf.mxu0
  %206 = vmatprep.mubr.bf16.mxu0 0
  %207 = vmatmul.mubr.bf16.gmra.mxu0 %v132
  %v208 = vpop.f32.mrf.mxu0
  %v209 = vadd.f32 0.0, %v208
  %v210 = vpop.f32.mrf.mxu0
  %v211 = vpop.f32.mrf.mxu0
  %v212 = vadd.f32 0.0, %v211
  %v213 = vpop.f32.mrf.mxu0
  %214 = vmatprep.mubr.bf16.mxu0 0
  %215 = vmatmul.mubr.bf16.gmra.mxu0 %v135
  %v216 = vpop.f32.mrf.mxu0
  %v217 = vadd.f32 0.0, %v216
  %v218 = vpop.f32.mrf.mxu0
  %v219 = vpop.f32.mrf.mxu0
  %v220 = vadd.f32 0.0, %v219
  %v221 = vpop.f32.mrf.mxu0
  %222 = vmatprep.mubr.bf16.mxu0 0
  %223 = vmatmul.mubr.bf16.gmra.mxu0 %v138
  %v224 = vpop.f32.mrf.mxu0
  %v225 = vadd.f32 0.0, %v224
  %v226 = vpop.f32.mrf.mxu0
  %v227 = vpop.f32.mrf.mxu0
  %v228 = vadd.f32 0.0, %v227
  %v229 = vpop.f32.mrf.mxu0
  %230 = vmatprep.mubr.bf16.mxu0 0
  %231 = vmatmul.mubr.bf16.gmra.mxu0 %v141
  %v232 = vpop.f32.mrf.mxu0
  %v233 = vadd.f32 0.0, %v232
  %v234 = vpop.f32.mrf.mxu0
  %v235 = vpop.f32.mrf.mxu0
  %v236 = vadd.f32 0.0, %v235
  %v237 = vpop.f32.mrf.mxu0
  %238 = vmatprep.mubr.bf16.mxu0 0
  %239 = vmatmul.mubr.bf16.gmra.mxu0 %v144
  %v240 = vpop.f32.mrf.mxu0
  %v241 = vadd.f32 0.0, %v240
  %v242 = vpop.f32.mrf.mxu0
  %v243 = vpop.f32.mrf.mxu0
  %v244 = vadd.f32 0.0, %v243
  %v245 = vpop.f32.mrf.mxu0
  %246 = vdwg.mxu0
  %v247 = vpack.c.bf16 %v188, %v185
  %v248 = vpack.c.bf16 %v196, %v193
  %v249 = vpack.c.bf16 %v204, %v201
  %v250 = vpack.c.bf16 %v212, %v209
  %v251 = vpack.c.bf16 %v220, %v217
  %v252 = vpack.c.bf16 %v228, %v225
  %v253 = vpack.c.bf16 %v236, %v233
  %v254 = vpack.c.bf16 %v244, %v241
  %v263 = vunpack.c.l.b16 %v247
  %v264 = vunpack.c.h.b16 %v247
  %v265 = vunpack.c.l.b16 %v248
  %v266 = vunpack.c.h.b16 %v248
  %v267 = vunpack.c.l.b16 %v249
  %v268 = vunpack.c.h.b16 %v249
  %v269 = vunpack.c.l.b16 %v250
  %v270 = vunpack.c.h.b16 %v250
  %v271 = vunpack.c.l.b16 %v251
  %v272 = vunpack.c.h.b16 %v251
  %v273 = vunpack.c.l.b16 %v252
  %v274 = vunpack.c.h.b16 %v252
  %v275 = vunpack.c.l.b16 %v253
  %v276 = vunpack.c.h.b16 %v253
  %v277 = vunpack.c.l.b16 %v254
  %v278 = vunpack.c.h.b16 %v254
  %v279 = vpack.c.b16 %v263, %v263
  %v280 = vpack.c.b16 %v264, %v264
  %v281 = vpack.c.b16 %v265, %v265
  %v282 = vpack.c.b16 %v266, %v266
  %v283 = vpack.c.b16 %v267, %v267
  %v284 = vpack.c.b16 %v268, %v268
  %v285 = vpack.c.b16 %v269, %v269
  %v286 = vpack.c.b16 %v270, %v270
  %v287 = vpack.c.b16 %v271, %v271
  %v288 = vpack.c.b16 %v272, %v272
  %v289 = vpack.c.b16 %v273, %v273
  %v290 = vpack.c.b16 %v274, %v274
  %v291 = vpack.c.b16 %v275, %v275
  %v292 = vpack.c.b16 %v276, %v276
  %v293 = vpack.c.b16 %v277, %v277
  %v294 = vpack.c.b16 %v278, %v278
  %vm311 = vcmask 519168
  %312 = vst.msk [vmem:[%s4] sm:$0xf] %vm311, %v279
  %313 = vst.msk [vmem:[%s4 + $0x4] sm:$0xf] %vm311, %v280
  %314 = vst.msk [vmem:[%s4 + $0x8] sm:$0xf] %vm311, %v281
  %315 = vst.msk [vmem:[%s4 + $0xc] sm:$0xf] %vm311, %v282
  %316 = vst.msk [vmem:[%s4 + $0x10] sm:$0xf] %vm311, %v283
  %317 = vst.msk [vmem:[%s4 + $0x14] sm:$0xf] %vm311, %v284
  %318 = vst.msk [vmem:[%s4 + $0x18] sm:$0xf] %vm311, %v285
  %319 = vst.msk [vmem:[%s4 + $0x1c] sm:$0xf] %vm311, %v286
  %320 = vst.msk [vmem:[%s4 + $0x20] sm:$0xf] %vm311, %v287
  %321 = vst.msk [vmem:[%s4 + $0x24] sm:$0xf] %vm311, %v288
  %322 = vst.msk [vmem:[%s4 + $0x28] sm:$0xf] %vm311, %v289
  %323 = vst.msk [vmem:[%s4 + $0x2c] sm:$0xf] %vm311, %v290
  %324 = vst.msk [vmem:[%s4 + $0x30] sm:$0xf] %vm311, %v291
  %325 = vst.msk [vmem:[%s4 + $0x34] sm:$0xf] %vm311, %v292
  %326 = vst.msk [vmem:[%s4 + $0x38] sm:$0xf] %vm311, %v293
  %327 = vst.msk [vmem:[%s4 + $0x3c] sm:$0xf] %vm311, %v294
  // Predicated region
  $region18: #{decoder_forward.8} parent=0 // pred_check
    _
  $region19: #{decoder_forward.8} parent=0 // pred_check_branch
    %329 = sbr.rel (0) target = $region21
  $region20: #{decoder_forward.8} parent=0 // pred_region
    _
  $region21: #{decoder_forward.8} parent=0 // pred_fallthru
    _
  // Predicated region
  $region22: #{decoder_forward.8} parent=0 // pred_check
    _
  $region23: #{decoder_forward.8} parent=0 // pred_check_branch
    %331 = sbr.rel (0) target = $region25
  $region24: #{decoder_forward.8} parent=0 // pred_region
    _
  $region25: #{decoder_forward.8} parent=0 // pred_fallthru
    _

// kernel: decoder_forward.9
$region0: #{decoder_forward.9}
  #allocation0 [shape = 'u32[]', space=smem, size = 0x4, offset = 0x4, fixed_abs, tag = 'smem constant byte address 0x4 - core index']
  #allocation1 [shape = 'u32[144,128]{1,0:T(1,128)}', space=vmem, size = 0x12000, scoped, tag = 'internal scratch']
  %s0 = inlined_call_operand.vmem [shape: bf16[2,256,4], index: 0, kind: input, shape index: {}]
  %s1 = inlined_call_operand.vmem [shape: f32[1,4], index: 1, kind: input, shape index: {}]
  %s2 = inlined_call_operand.vmem [shape: f32[1,4], index: 2, kind: input, shape index: {}]
  %s3 = inlined_call_operand.vmem [shape: bf16[8,4], index: 3, kind: input, shape index: {}]
  %s4 = inlined_call_operand.vmem [shape: f32[8,1], index: 4, kind: input, shape index: {}]
  %s5 = inlined_call_operand.vmem [shape: f32[2,8,256], index: 5, kind: output, shape index: {}]
  %s6 = sld [smem:[#allocation0]]
  $region53: #{decoder_forward.9} parent=0
    _
  %s8 = ssub.s32 1, %s6
  %s9 = scalar_select 0, %s8, %s6
  loop: start=0, step=1, limit=4
  $region2: #{decoder_forward.9} parent=0 // loop_pre_header
    _
  $region3: #{decoder_forward.9} parent=0 // loop_header
    %s11 = sphi 0, %s15
    %p12 = scmp.ge.s32.totalorder %s11, 4
    %s18 = sphi 0, %s30
    %s19 = sphi 0, %s26
    %s20 = sphi 0, %s18
    %s21 = sphi 0, %s19
    %s22 = sphi 0, %s20
    %s23 = sphi 0, %s21
    %s35 = sphi 0, %s37
    %s38 = sphi 0, %s35
    %s39 = sphi 0, %s38
    %s55 = sphi 0, %s39
    %s59 = sphi 0, %s59
    %s61 = sphi 0, %s59
    %s62 = sphi 0, %s61
    %s76 = sphi 0, %s62
    %s80 = sphi 0, %s80
    %s82 = sphi 0, %s80
    %s83 = sphi 0, %s82
    %s97 = sphi 0, %s83
    %s101 = sphi 0, %s101
    %s103 = sphi 0, %s101
    %s104 = sphi 0, %s103
    %s118 = sphi 0, %s104
    %s122 = sphi 0, %s122
    %s124 = sphi 0, %s122
    %s125 = sphi 0, %s124
    %s139 = sphi 0, %s125
    %s147 = sphi 0, %s149
    %s150 = sphi 0, %s147
    %s151 = sphi 0, %s150
    %s167 = sphi 0, %s151
  $region4: #{decoder_forward.9} parent=0 // loop_header_branch
    %14 = sbr.rel (%p12) target = $region8
  $region5: #{decoder_forward.9} parent=0 // loop_body
    %s16 = ssub.s32 %s11, 1
    %s17 = ssub.s32 %s11, 2
    %s24 = sadd.s32 1, %s19
    %p25 = scmp.ge.s32.totalorder %s24, 1
    %s26 = scalar_select %p25, 0, %s24
    %s27 = sadd.s32 1, %s18
    %s28 = scalar_select %p25, %s27, %s18
    %p29 = scmp.ge.s32.totalorder %s28, 2
    %s30 = scalar_select %p29, 0, %s28
    %s31 = ssub.s32 %s18, %s30
    %s32 = ssub.s32 %s19, %s26
    %s33 = sor.u32 %s31, %s32
    %p34 = scmp.eq.s32.totalorder %s33, 0
    %s36 = sadd.s32 %s35, 1
    %s37 = scalar_select %p34, %s35, %s36
    %p40 = pneg %p34
    %p41 = scmp.eq.s32.totalorder %s11, 1
    %p42 = por %p40, %p41
    %p43 = scmp.ne.s32.totalorder %s35, %s38
    %p44 = scmp.eq.s32.totalorder %s11, 0
    %p45 = por %p43, %p44
    %p46 = scmp.ne.s32.totalorder %s35, %s38
    %p47 = scmp.eq.s32.totalorder %s16, 1
    %p48 = por %p46, %p47
    %p49 = scmp.ne.s32.totalorder %s38, %s39
    %p50 = scmp.eq.s32.totalorder %s16, 0
    %p51 = por %p49, %p50
    %p52 = scmp.ne.s32.totalorder %s38, %s39
    %p53 = scmp.eq.s32.totalorder %s17, 1
    %p54 = por %p52, %p53
    %p56 = scmp.ne.s32.totalorder %s39, %s55
    %p57 = scmp.eq.s32.totalorder %s17, 0
    %p58 = por %p56, %p57
    %s60 = sadd.s32 %s59, 1
    %p63 = scmp.eq.s32.totalorder %s11, 1
    %p64 = scmp.ne.s32.totalorder %s59, %s61
    %p65 = scmp.eq.s32.totalorder %s11, 0
    %p66 = por %p64, %p65
    %p67 = scmp.ne.s32.totalorder %s59, %s61
    %p68 = scmp.eq.s32.totalorder %s16, 1
    %p69 = por %p67, %p68
    %p70 = scmp.ne.s32.totalorder %s61, %s62
    %p71 = scmp.eq.s32.totalorder %s16, 0
    %p72 = por %p70, %p71
    %p73 = scmp.ne.s32.totalorder %s61, %s62
    %p74 = scmp.eq.s32.totalorder %s17, 1
    %p75 = por %p73, %p74
    %p77 = scmp.ne.s32.totalorder %s62, %s76
    %p78 = scmp.eq.s32.totalorder %s17, 0
    %p79 = por %p77, %p78
    %s81 = sadd.s32 %s80, 1
    %p84 = scmp.eq.s32.totalorder %s11, 1
    %p85 = scmp.ne.s32.totalorder %s80, %s82
    %p86 = scmp.eq.s32.totalorder %s11, 0
    %p87 = por %p85, %p86
    %p88 = scmp.ne.s32.totalorder %s80, %s82
    %p89 = scmp.eq.s32.totalorder %s16, 1
    %p90 = por %p88, %p89
    %p91 = scmp.ne.s32.totalorder %s82, %s83
    %p92 = scmp.eq.s32.totalorder %s16, 0
    %p93 = por %p91, %p92
    %p94 = scmp.ne.s32.totalorder %s82, %s83
    %p95 = scmp.eq.s32.totalorder %s17, 1
    %p96 = por %p94, %p95
    %p98 = scmp.ne.s32.totalorder %s83, %s97
    %p99 = scmp.eq.s32.totalorder %s17, 0
    %p100 = por %p98, %p99
    %s102 = sadd.s32 %s101, 1
    %p105 = scmp.eq.s32.totalorder %s11, 1
    %p106 = scmp.ne.s32.totalorder %s101, %s103
    %p107 = scmp.eq.s32.totalorder %s11, 0
    %p108 = por %p106, %p107
    %p109 = scmp.ne.s32.totalorder %s101, %s103
    %p110 = scmp.eq.s32.totalorder %s16, 1
    %p111 = por %p109, %p110
    %p112 = scmp.ne.s32.totalorder %s103, %s104
    %p113 = scmp.eq.s32.totalorder %s16, 0
    %p114 = por %p112, %p113
    %p115 = scmp.ne.s32.totalorder %s103, %s104
    %p116 = scmp.eq.s32.totalorder %s17, 1
    %p117 = por %p115, %p116
    %p119 = scmp.ne.s32.totalorder %s104, %s118
    %p120 = scmp.eq.s32.totalorder %s17, 0
    %p121 = por %p119, %p120
    %s123 = sadd.s32 %s122, 1
    %p126 = scmp.eq.s32.totalorder %s11, 1
    %p127 = scmp.ne.s32.totalorder %s122, %s124
    %p128 = scmp.eq.s32.totalorder %s11, 0
    %p129 = por %p127, %p128
    %p130 = scmp.ne.s32.totalorder %s122, %s124
    %p131 = scmp.eq.s32.totalorder %s16, 1
    %p132 = por %p130, %p131
    %p133 = scmp.ne.s32.totalorder %s124, %s125
    %p134 = scmp.eq.s32.totalorder %s16, 0
    %p135 = por %p133, %p134
    %p136 = scmp.ne.s32.totalorder %s124, %s125
    %p137 = scmp.eq.s32.totalorder %s17, 1
    %p138 = por %p136, %p137
    %p140 = scmp.ne.s32.totalorder %s125, %s139
    %p141 = scmp.eq.s32.totalorder %s17, 0
    %p142 = por %p140, %p141
    %s143 = ssub.s32 %s18, %s30
    %s144 = ssub.s32 %s19, %s26
    %s145 = sor.u32 %s143, %s144
    %p146 = scmp.eq.s32.totalorder %s145, 0
    %s148 = sadd.s32 %s147, 1
    %s149 = scalar_select %p146, %s147, %s148
    %p152 = pneg %p146
    %p153 = scmp.eq.s32.totalorder %s11, 1
    %p154 = por %p152, %p153
    %p155 = scmp.ne.s32.totalorder %s147, %s150
    %p156 = scmp.eq.s32.totalorder %s11, 0
    %p157 = por %p155, %p156
    %p158 = scmp.ne.s32.totalorder %s147, %s150
    %p159 = scmp.eq.s32.totalorder %s16, 1
    %p160 = por %p158, %p159
    %p161 = scmp.ne.s32.totalorder %s150, %s151
    %p162 = scmp.eq.s32.totalorder %s16, 0
    %p163 = por %p161, %p162
    %p164 = scmp.ne.s32.totalorder %s150, %s151
    %p165 = scmp.eq.s32.totalorder %s17, 1
    %p166 = por %p164, %p165
    %p168 = scmp.ne.s32.totalorder %s151, %s167
    %p169 = scmp.eq.s32.totalorder %s17, 0
    %p170 = por %p168, %p169
    %p171 = scmp.le.s32.totalorder 1, %s11
    %p172 = scmp.lt.s32.totalorder %s11, 3
    %p173 = pnand %p171, %p172
    %p174 = pneg %p173
    // Predicated region
    $region9: #{decoder_forward.9} parent=5 // pred_check
      _
    $region10: #{decoder_forward.9} parent=5 // pred_check_branch
      %176 = sbr.rel (%p173) target = $region12
    $region11: #{decoder_forward.9} parent=5 // pred_region
      %s177 = ssub.s32 %s11, 1
      // Predicated region
      $region13: #{decoder_forward.9} parent=11 // pred_check
        %p178 = pneg %p72
      $region14: #{decoder_forward.9} parent=11 // pred_check_branch
        %180 = sbr.rel (%p178) target = $region16
      $region15: #{decoder_forward.9} parent=11 // pred_region
        _
      $region16: #{decoder_forward.9} parent=11 // pred_fallthru
        _
      // Predicated region
      $region17: #{decoder_forward.9} parent=11 // pred_check
        %p181 = pneg %p93
      $region18: #{decoder_forward.9} parent=11 // pred_check_branch
        %183 = sbr.rel (%p181) target = $region20
      $region19: #{decoder_forward.9} parent=11 // pred_region
        _
      $region20: #{decoder_forward.9} parent=11 // pred_fallthru
        _
      // Predicated region
      $region21: #{decoder_forward.9} parent=11 // pred_check
        %p184 = pneg %p114
      $region22: #{decoder_forward.9} parent=11 // pred_check_branch
        %186 = sbr.rel (%p184) target = $region24
      $region23: #{decoder_forward.9} parent=11 // pred_region
        _
      $region24: #{decoder_forward.9} parent=11 // pred_fallthru
        _
      // Predicated region
      $region25: #{decoder_forward.9} parent=11 // pred_check
        %p187 = pneg %p135
      $region26: #{decoder_forward.9} parent=11 // pred_check_branch
        %189 = sbr.rel (%p187) target = $region28
      $region27: #{decoder_forward.9} parent=11 // pred_region
        _
      $region28: #{decoder_forward.9} parent=11 // pred_fallthru
        _
    $region12: #{decoder_forward.9} parent=5 // pred_fallthru
      _
    %p190 = scmp.lt.s32.totalorder %s11, 2
    // Predicated region
    $region29: #{decoder_forward.9} parent=5 // pred_check
      %p191 = pneg %p190
    $region30: #{decoder_forward.9} parent=5 // pred_check_branch
      %193 = sbr.rel (%p191) target = $region32
    $region31: #{decoder_forward.9} parent=5 // pred_region
      // Predicated region
      $region33: #{decoder_forward.9} parent=31 // pred_check
        %p194 = pneg %p45
      $region34: #{decoder_forward.9} parent=31 // pred_check_branch
        %196 = sbr.rel (%p194) target = $region36
      $region35: #{decoder_forward.9} parent=31 // pred_region
        %s197 = smul.u32 32, %s19
        %p198 = scmp.lt.s32.totalorder %s18, 1
        %s199 = scalar_select %p198, %s18, 1
        %p200 = scmp.lt.s32.totalorder %s197, 31
        %s201 = scalar_select %p200, %s197, 31
        %s202 = smul.addr %s199, 32
        %s203 = sadd.s32 %s201, %s202
        %s204 = smul.addr %s203, 4
        %s205 = scalar_lea.vmem %s0, %s204
        %s206 = smul.u32 32, %s19
      $region36: #{decoder_forward.9} parent=31 // pred_fallthru
        _
    $region32: #{decoder_forward.9} parent=5 // pred_fallthru
      _
    %p207 = scmp.le.s32.totalorder 1, %s11
    %p208 = scmp.lt.s32.totalorder %s11, 3
    %p209 = pnand %p207, %p208
    %p210 = pneg %p209
    // Predicated region
    $region37: #{decoder_forward.9} parent=5 // pred_check
      _
    $region38: #{decoder_forward.9} parent=5 // pred_check_branch
      %212 = sbr.rel (%p209) target = $region40
    $region39: #{decoder_forward.9} parent=5 // pred_region
      %s213 = ssub.s32 %s11, 1
      %s214 = smul.u32 32, %s21
      %p215 = scmp.lt.s32.totalorder %s20, 1
      %s216 = scalar_select %p215, %s20, 1
      %p217 = scmp.lt.s32.totalorder %s214, 31
      %s218 = scalar_select %p217, %s214, 31
      %s219 = smul.addr %s216, 32
      %s220 = sadd.s32 %s218, %s219
      %s221 = smul.addr %s220, 4
      %s222 = scalar_lea.vmem %s0, %s221
      %p223 = pneg %p51
      %p224 = pneg %p48
      %p225 = pneg %p72
      %p226 = pneg %p69
      %p227 = pneg %p93
      %p228 = pneg %p90
      %p229 = pneg %p114
      %p230 = pneg %p111
      %p231 = pneg %p135
      %p232 = pneg %p132
      %p233 = pneg %p163
      %p234 = pneg %p160
      %s235 = smul.u32 2, %s21
      %p236 = scmp.lt.s32.totalorder %s20, 1
      %s237 = scalar_select %p236, %s20, 1
      %p238 = scmp.lt.s32.totalorder %s235, 1
      %s239 = scalar_select %p238, %s235, 1
      %s240 = smul.addr %s237, 2
      %s241 = sadd.s32 %s239, %s240
      %s242 = smul.addr %s241, 8
      %s243 = scalar_lea.vmem %s5, %s242
      %s244 = smul.u32 32, %s21
      %p245 = scmp.lt.s32.totalorder %s20, 1
      %s246 = scalar_select %p245, %s20, 1
      %p247 = scmp.lt.s32.totalorder %s244, 31
      %s248 = scalar_select %p247, %s244, 31
      %s249 = smul.addr %s246, 32
      %s250 = sadd.s32 %s248, %s249
      %s251 = smul.addr %s250, 4
      %s252 = scalar_lea.vmem %s0, %s251
      %s253 = smul.u32 32, %s21
      %s254 = smul.u32 2, %s21
      %p255 = scmp.lt.s32.totalorder %s20, 1
      %s256 = scalar_select %p255, %s20, 1
      %p257 = scmp.lt.s32.totalorder %s254, 1
      %s258 = scalar_select %p257, %s254, 1
      %s259 = smul.addr %s256, 2
      %s260 = sadd.s32 %s258, %s259
      %s261 = smul.addr %s260, 8
      %s262 = scalar_lea.vmem %s5, %s261
      %s263 = smul.u32 2, %s21
      %v265 = vld [vmem:[%s252] sm:$0xf]
      %v266 = vld [vmem:[%s252 + $0x4] sm:$0xf]
      %v267 = vld [vmem:[%s252 + $0x8] sm:$0xf]
      %v268 = vld [vmem:[%s252 + $0xc] sm:$0xf]
      %v269 = vld [vmem:[%s252 + $0x10] sm:$0xf]
      %v270 = vld [vmem:[%s252 + $0x14] sm:$0xf]
      %v271 = vld [vmem:[%s252 + $0x18] sm:$0xf]
      %v272 = vld [vmem:[%s252 + $0x1c] sm:$0xf]
      %v273 = vld [vmem:[%s252 + $0x20] sm:$0xf]
      %v274 = vld [vmem:[%s252 + $0x24] sm:$0xf]
      %v275 = vld [vmem:[%s252 + $0x28] sm:$0xf]
      %v276 = vld [vmem:[%s252 + $0x2c] sm:$0xf]
      %v277 = vld [vmem:[%s252 + $0x30] sm:$0xf]
      %v278 = vld [vmem:[%s252 + $0x34] sm:$0xf]
      %v279 = vld [vmem:[%s252 + $0x38] sm:$0xf]
      %v280 = vld [vmem:[%s252 + $0x3c] sm:$0xf]
      %v281 = vld [vmem:[%s252 + $0x40] sm:$0xf]
      %v282 = vld [vmem:[%s252 + $0x44] sm:$0xf]
      %v283 = vld [vmem:[%s252 + $0x48] sm:$0xf]
      %v284 = vld [vmem:[%s252 + $0x4c] sm:$0xf]
      %v285 = vld [vmem:[%s252 + $0x50] sm:$0xf]
      %v286 = vld [vmem:[%s252 + $0x54] sm:$0xf]
      %v287 = vld [vmem:[%s252 + $0x58] sm:$0xf]
      %v288 = vld [vmem:[%s252 + $0x5c] sm:$0xf]
      %v289 = vld [vmem:[%s252 + $0x60] sm:$0xf]
      %v290 = vld [vmem:[%s252 + $0x64] sm:$0xf]
      %v291 = vld [vmem:[%s252 + $0x68] sm:$0xf]
      %v292 = vld [vmem:[%s252 + $0x6c] sm:$0xf]
      %v293 = vld [vmem:[%s252 + $0x70] sm:$0xf]
      %v294 = vld [vmem:[%s252 + $0x74] sm:$0xf]
      %v295 = vld [vmem:[%s252 + $0x78] sm:$0xf]
      %v296 = vld [vmem:[%s252 + $0x7c] sm:$0xf]
      %v297 = vunpack.c.l.bf16 %v265
      %v298 = vunpack.c.l.bf16 %v266
      %v299 = vunpack.c.l.bf16 %v267
      %v300 = vunpack.c.l.bf16 %v268
      %v301 = vunpack.c.l.bf16 %v269
      %v302 = vunpack.c.l.bf16 %v270
      %v303 = vunpack.c.l.bf16 %v271
      %v304 = vunpack.c.l.bf16 %v272
      %v305 = vunpack.c.l.bf16 %v273
      %v306 = vunpack.c.l.bf16 %v274
      %v307 = vunpack.c.l.bf16 %v275
      %v308 = vunpack.c.l.bf16 %v276
      %v309 = vunpack.c.l.bf16 %v277
      %v310 = vunpack.c.l.bf16 %v278
      %v311 = vunpack.c.l.bf16 %v279
      %v312 = vunpack.c.l.bf16 %v280
      %v313 = vunpack.c.l.bf16 %v281
      %v314 = vunpack.c.l.bf16 %v282
      %v315 = vunpack.c.l.bf16 %v283
      %v316 = vunpack.c.l.bf16 %v284
      %v317 = vunpack.c.l.bf16 %v285
      %v318 = vunpack.c.l.bf16 %v286
      %v319 = vunpack.c.l.bf16 %v287
      %v320 = vunpack.c.l.bf16 %v288
      %v321 = vunpack.c.l.bf16 %v289
      %v322 = vunpack.c.l.bf16 %v290
      %v323 = vunpack.c.l.bf16 %v291
      %v324 = vunpack.c.l.bf16 %v292
      %v325 = vunpack.c.l.bf16 %v293
      %v326 = vunpack.c.l.bf16 %v294
      %v327 = vunpack.c.l.bf16 %v295
      %v328 = vunpack.c.l.bf16 %v296
      %v329 = vld [vmem:[%s1] sm:$0x1]
      %v331 = vlaneseq
      %v332 = vshrl.u32 %v331, 7
      %v333 = vsub.s32 0, %v332
      %v334 = vrot.slane %v329, %v333
      %v336 = vmul.f32 %v297, %v334
      %v337 = vmul.f32 %v298, %v334
      %v338 = vmul.f32 %v299, %v334
      %v339 = vmul.f32 %v300, %v334
      %v340 = vmul.f32 %v301, %v334
      %v341 = vmul.f32 %v302, %v334
      %v342 = vmul.f32 %v303, %v334
      %v343 = vmul.f32 %v304, %v334
      %v344 = vmul.f32 %v305, %v334
      %v345 = vmul.f32 %v306, %v334
      %v346 = vmul.f32 %v307, %v334
      %v347 = vmul.f32 %v308, %v334
      %v348 = vmul.f32 %v309, %v334
      %v349 = vmul.f32 %v310, %v334
      %v350 = vmul.f32 %v311, %v334
      %v351 = vmul.f32 %v312, %v334
      %v352 = vmul.f32 %v313, %v334
      %v353 = vmul.f32 %v314, %v334
      %v354 = vmul.f32 %v315, %v334
      %v355 = vmul.f32 %v316, %v334
      %v356 = vmul.f32 %v317, %v334
      %v357 = vmul.f32 %v318, %v334
      %v358 = vmul.f32 %v319, %v334
      %v359 = vmul.f32 %v320, %v334
      %v360 = vmul.f32 %v321, %v334
      %v361 = vmul.f32 %v322, %v334
      %v362 = vmul.f32 %v323, %v334
      %v363 = vmul.f32 %v324, %v334
      %v364 = vmul.f32 %v325, %v334
      %v365 = vmul.f32 %v326, %v334
      %v366 = vmul.f32 %v327, %v334
      %v367 = vmul.f32 %v328, %v334
      %v368 = vld [vmem:[%s2] sm:$0x1]
      %v370 = vlaneseq
      %v371 = vshrl.u32 %v370, 7
      %v372 = vsub.s32 0, %v371
      %v373 = vrot.slane %v368, %v372
      %v375 = vadd.f32 %v336, %v373
      %v376 = vadd.f32 %v337, %v373
      %v377 = vadd.f32 %v338, %v373
      %v378 = vadd.f32 %v339, %v373
      %v379 = vadd.f32 %v340, %v373
      %v380 = vadd.f32 %v341, %v373
      %v381 = vadd.f32 %v342, %v373
      %v382 = vadd.f32 %v343, %v373
      %v383 = vadd.f32 %v344, %v373
      %v384 = vadd.f32 %v345, %v373
      %v385 = vadd.f32 %v346, %v373
      %v386 = vadd.f32 %v347, %v373
      %v387 = vadd.f32 %v348, %v373
      %v388 = vadd.f32 %v349, %v373
      %v389 = vadd.f32 %v350, %v373
      %v390 = vadd.f32 %v351, %v373
      %v391 = vadd.f32 %v352, %v373
      %v392 = vadd.f32 %v353, %v373
      %v393 = vadd.f32 %v354, %v373
      %v394 = vadd.f32 %v355, %v373
      %v395 = vadd.f32 %v356, %v373
      %v396 = vadd.f32 %v357, %v373
      %v397 = vadd.f32 %v358, %v373
      %v398 = vadd.f32 %v359, %v373
      %v399 = vadd.f32 %v360, %v373
      %v400 = vadd.f32 %v361, %v373
      %v401 = vadd.f32 %v362, %v373
      %v402 = vadd.f32 %v363, %v373
      %v403 = vadd.f32 %v364, %v373
      %v404 = vadd.f32 %v365, %v373
      %v405 = vadd.f32 %v366, %v373
      %v406 = vadd.f32 %v367, %v373
      %v407 = vmax.f32 %v375, 0.0
      %v408 = vmax.f32 %v376, 0.0
      %v409 = vmax.f32 %v377, 0.0
      %v410 = vmax.f32 %v378, 0.0
      %v411 = vmax.f32 %v379, 0.0
      %v412 = vmax.f32 %v380, 0.0
      %v413 = vmax.f32 %v381, 0.0
      %v414 = vmax.f32 %v382, 0.0
      %v415 = vmax.f32 %v383, 0.0
      %v416 = vmax.f32 %v384, 0.0
      %v417 = vmax.f32 %v385, 0.0
      %v418 = vmax.f32 %v386, 0.0
      %v419 = vmax.f32 %v387, 0.0
      %v420 = vmax.f32 %v388, 0.0
      %v421 = vmax.f32 %v389, 0.0
      %v422 = vmax.f32 %v390, 0.0
      %v423 = vmax.f32 %v391, 0.0
      %v424 = vmax.f32 %v392, 0.0
      %v425 = vmax.f32 %v393, 0.0
      %v426 = vmax.f32 %v394, 0.0
      %v427 = vmax.f32 %v395, 0.0
      %v428 = vmax.f32 %v396, 0.0
      %v429 = vmax.f32 %v397, 0.0
      %v430 = vmax.f32 %v398, 0.0
      %v431 = vmax.f32 %v399, 0.0
      %v432 = vmax.f32 %v400, 0.0
      %v433 = vmax.f32 %v401, 0.0
      %v434 = vmax.f32 %v402, 0.0
      %v435 = vmax.f32 %v403, 0.0
      %v436 = vmax.f32 %v404, 0.0
      %v437 = vmax.f32 %v405, 0.0
      %v438 = vmax.f32 %v406, 0.0
      %v439 = vld [vmem:[%s3] sm:$0xf]
      %v440 = vpack.c.bf16 %v408, %v407
      %v441 = vpack.c.bf16 %v410, %v409
      %v442 = vpack.c.bf16 %v412, %v411
      %v443 = vpack.c.bf16 %v414, %v413
      %v444 = vpack.c.bf16 %v416, %v415
      %v445 = vpack.c.bf16 %v418, %v417
      %v446 = vpack.c.bf16 %v420, %v419
      %v447 = vpack.c.bf16 %v422, %v421
      %v448 = vpack.c.bf16 %v424, %v423
      %v449 = vpack.c.bf16 %v426, %v425
      %v450 = vpack.c.bf16 %v428, %v427
      %v451 = vpack.c.bf16 %v430, %v429
      %v452 = vpack.c.bf16 %v432, %v431
      %v453 = vpack.c.bf16 %v434, %v433
      %v454 = vpack.c.bf16 %v436, %v435
      %v455 = vpack.c.bf16 %v438, %v437
      %v456 = vld [vmem:[%s4] sm:$0xff]
      %458 = vset.pattern.permute.xlu0 0
      %459 = vperm.xlu0 %458, %v456
      %v460 = vpop.permute.xlu0 %459
      %vm462 = vcmask 31744
      %v464 = vsel %vm462, %v439, 0
      %v467 = vsel %vm462, %v440, 0
      %v470 = vsel %vm462, %v441, 0
      %v473 = vsel %vm462, %v442, 0
      %v476 = vsel %vm462, %v443, 0
      %v479 = vsel %vm462, %v444, 0
      %v482 = vsel %vm462, %v445, 0
      %v485 = vsel %vm462, %v446, 0
      %v488 = vsel %vm462, %v447, 0
      %v491 = vsel %vm462, %v448, 0
      %v494 = vsel %vm462, %v449, 0
      %v497 = vsel %vm462, %v450, 0
      %v500 = vsel %vm462, %v451, 0
      %v503 = vsel %vm462, %v452, 0
      %v506 = vsel %vm462, %v453, 0
      %v509 = vsel %vm462, %v454, 0
      %v512 = vsel %vm462, %v455, 0
      %514 = vmatprep.subr.bf16.mxu0 0
      %515 = vmatpush1.bf16.xpose.msra.mxu0 %v488
      %516 = vmatprep.subr.bf16.mxu0 0
      %517 = vmatpush1.bf16.xpose.msra.mxu0 %v485
      %518 = vmatprep.subr.bf16.mxu0 0
      %519 = vmatpush1.bf16.xpose.msra.mxu0 %v482
      %520 = vmatprep.subr.bf16.mxu0 0
      %521 = vmatpush1.bf16.xpose.msra.mxu0 %v479
      %522 = vmatprep.subr.bf16.mxu0 0
      %523 = vmatpush1.bf16.xpose.msra.mxu0 %v476
      %524 = vmatprep.subr.bf16.mxu0 0
      %525 = vmatpush1.bf16.xpose.msra.mxu0 %v473
      %526 = vmatprep.subr.bf16.mxu0 0
      %527 = vmatpush1.bf16.xpose.msra.mxu0 %v470
      %528 = vmatprep.subr.bf16.mxu0 0
      %529 = vmatpush1.bf16.xpose.msra.mxu0 %v467
      %530 = vmatprep.subr.bf16.mxu0 0
      %531 = vmatpush2.bf16.xpose.msra.mxu0 %v512
      %532 = vmatprep.subr.bf16.mxu0 0
      %533 = vmatpush2.bf16.xpose.msra.mxu0 %v509
      %534 = vmatprep.subr.bf16.mxu0 0
      %535 = vmatpush2.bf16.xpose.msra.mxu0 %v506
      %536 = vmatprep.subr.bf16.mxu0 0
      %537 = vmatpush2.bf16.xpose.msra.mxu0 %v503
      %538 = vmatprep.subr.bf16.mxu0 0
      %539 = vmatpush2.bf16.xpose.msra.mxu0 %v500
      %540 = vmatprep.subr.bf16.mxu0 0
      %541 = vmatpush2.bf16.xpose.msra.mxu0 %v497
      %542 = vmatprep.subr.bf16.mxu0 0
      %543 = vmatpush2.bf16.xpose.msra.mxu0 %v494
      %544 = vmatprep.subr.bf16.mxu0 0
      %545 = vmatpush2.bf16.xpose.msra.mxu0 %v491
      %546 = vmatprep.mubr.bf16.mxu0 0
      %547 = vmatmul.mubr.bf16.gmra.mxu0 %v464
      %v548 = vpop.f32.mrf.mxu0
      %v549 = vadd.f32 %v460, %v548
      %v550 = vpop.f32.mrf.mxu0
      %v551 = vadd.f32 %v460, %v550
      %v552 = vpop.f32.mrf.mxu0
      %v553 = vpop.f32.mrf.mxu0
      %554 = vdwg.mxu0
      %v555 = vtanh.pop %v549
      %v556 = vtanh.pop %v551
      %557 = vst [vmem:[%s262] sm:$0xff] %v555
      %558 = vst [vmem:[%s262 + $0x8] sm:$0xff] %v556
      %s559 = smul.u32 2, %s21
      %p560 = scmp.lt.s32.totalorder %s20, 1
      %s561 = scalar_select %p560, %s20, 1
      %p562 = scmp.lt.s32.totalorder %s559, 1
      %s563 = scalar_select %p562, %s559, 1
      %s564 = smul.addr %s561, 2
      %s565 = sadd.s32 %s563, %s564
      %s566 = smul.addr %s565, 8
      %s567 = scalar_lea.vmem %s5, %s566
      // Predicated region
      $region41: #{decoder_forward.9} parent=39 // pred_check
        %p568 = pneg %p160
      $region42: #{decoder_forward.9} parent=39 // pred_check_branch
        %570 = sbr.rel (%p568) target = $region44
      $region43: #{decoder_forward.9} parent=39 // pred_region
        %s571 = smul.u32 2, %s21
      $region44: #{decoder_forward.9} parent=39 // pred_fallthru
        _
    $region40: #{decoder_forward.9} parent=5 // pred_fallthru
      _
    %p572 = scmp.le.s32.totalorder 2, %s11
    // Predicated region
    $region45: #{decoder_forward.9} parent=5 // pred_check
      %p573 = pneg %p572
    $region46: #{decoder_forward.9} parent=5 // pred_check_branch
      %575 = sbr.rel (%p573) target = $region48
    $region47: #{decoder_forward.9} parent=5 // pred_region
      %s576 = ssub.s32 %s11, 2
      // Predicated region
      $region49: #{decoder_forward.9} parent=47 // pred_check
        %p577 = pneg %p166
      $region50: #{decoder_forward.9} parent=47 // pred_check_branch
        %579 = sbr.rel (%p577) target = $region52
      $region51: #{decoder_forward.9} parent=47 // pred_region
        %s580 = smul.u32 2, %s23
        %p581 = scmp.lt.s32.totalorder %s22, 1
        %s582 = scalar_select %p581, %s22, 1
        %p583 = scmp.lt.s32.totalorder %s580, 1
        %s584 = scalar_select %p583, %s580, 1
        %s585 = smul.addr %s582, 2
        %s586 = sadd.s32 %s584, %s585
        %s587 = smul.addr %s586, 8
        %s588 = scalar_lea.vmem %s5, %s587
      $region52: #{decoder_forward.9} parent=47 // pred_fallthru
        _
    $region48: #{decoder_forward.9} parent=5 // pred_fallthru
      _
  $region6: #{decoder_forward.9} parent=0 // loop_footer
    %s15 = sadd.s32 1, %s11
  $region7: #{decoder_forward.9} parent=0 // loop_footer_branch
    %10 = sbr.rel target = $region3
  $region8: #{decoder_forward.9} parent=0 // loop_exit
    _

</llo_original>
